<compile_context>
chip_gen: v7x
topology: tpu7x:2x2x1
jax: 0.10.0
libtpu: 0.0.40
codegen_flags: <defaults>
</compile_context>

<pallas_src>
import functools

import jax
import jax.numpy as jnp
from jax import lax
from jax.experimental import pallas as pl
from jax.experimental.pallas import tpu as pltpu

EPS = 1e-5  # nn.InstanceNorm2d default eps (affine=False, biased variance)


def _round_up(x, m):
    return (x + m - 1) // m * m


def _tensorcores_per_chip():
    """2 for megacore / multi-TC parts (v4, v5p, v7x), else 1 (v5e, v6e)."""
    try:
        kind = jax.devices()[0].device_kind.lower()
    except Exception:
        return 1
    return 2 if any(tag in kind for tag in ("v7", "v5p", "v4")) else 1


def _pick_images_per_block(n, target, num_cores):
    # Single-TC (v5e/v6e): biggest block = fewest grid steps (per-step overhead
    # ~0.35us).  Multi-TC (v7x / megacore): keep >= num_cores grid steps so the
    # "parallel" batch axis shards across TensorCores.
    if num_cores > 1:
        target = min(target, max(1, -(-n // num_cores)))
    return max(1, min(target, n))


def _cap_images_for_vmem(bn, cin, cout, lp, s_cols, in_dtype, out_dtype,
                         budget_bytes=24 * 2**20):
    # Double-buffered input + output blocks must fit the budget comfortably.
    per_img = (cin * lp * jnp.dtype(in_dtype).itemsize
               + cout * s_cols * jnp.dtype(out_dtype).itemsize)
    return int(max(1, min(bn, budget_bytes // (2 * per_img))))


def _conv_in_relu_kernel(w_ref, mask_ref, x_ref, o_ref, *,
                         bn, lp, s_cols, tap_offsets, inv_count, use_act):
    # w_ref:    (KH*KW, Cout, Cin)  conv taps (grid-constant, stays resident)
    # mask_ref: (1, S)              f32 validity mask over the S stride-1 columns
    # x_ref:    (Cin, bn*Lp)        bn zero-padded flattened images, lane-contiguous
    # o_ref:    (bn, Cout, S)       per-image normalized (+ReLU) output, NCHW-flat
    wq = (bn - 1) * lp + s_cols          # lanes covered by one tap-shifted matmul
    x = x_ref[...]                       # single block load; taps are lane shifts

    # Conv = sum over taps of one shifted, lane-long MXU matmul (in-kernel
    # "im2col": no (K, HW) patch slab ever exists in HBM or VMEM).
    acc = None
    for t, d in enumerate(tap_offsets):
        xt = x[:, d:d + wq]                                         # (Cin, Wq)
        part = jnp.dot(w_ref[t], xt, preferred_element_type=jnp.float32)
        acc = part if acc is None else acc + part                   # (Cout, Wq) f32

    maskf = mask_ref[...]                                           # (1, S)
    for b in range(bn):          # small static loop; slices are 128-aligned
        a = acc[:, b * lp:b * lp + s_cols]                          # (Cout, S)
        am = a * maskf
        s1 = jnp.sum(am, axis=1, keepdims=True)                     # one-pass stats
        s2 = jnp.sum(am * a, axis=1, keepdims=True)
        mean = s1 * inv_count
        var = s2 * inv_count - mean * mean
        y = (a - mean) * lax.rsqrt(var + EPS)                       # EUP rsqrt
        if use_act:                                                 # ReLU
            y = jnp.maximum(y, 0.0)
        o_ref[b] = (y * maskf).astype(o_ref.dtype)                  # lane-dense store


@functools.partial(
    jax.jit,
    static_argnames=("stride", "padding", "use_act", "mxu_dtype", "out_dtype",
                     "images_per_block"),
)
def conv_block_forward(x, weight, *, stride=1, padding=1, use_act=True,
                       mxu_dtype=jnp.bfloat16, out_dtype=None,
                       images_per_block=16):
    """ConvBlock forward: Conv2d (bias cancelled) -> InstanceNorm2d -> ReLU.

    x: (N, Cin, H, W) NCHW; weight: (Cout, Cin, KH, KW).
    """
    n, cin, h, w = x.shape
    cout, cin_w, kh, kw = weight.shape
    assert cin_w == cin, "weight/input channel mismatch"
    s = stride
    hp, wp = h + 2 * padding, w + 2 * padding
    assert hp >= kh and wp >= kw, "kernel larger than padded input"

    ho = (hp - kh) // s + 1              # real (strided) output size
    wo = (wp - kw) // s + 1
    ho1 = hp - kh + 1                    # stride-1 full-grid output height
    s_cols = ho1 * wp                    # per-image columns computed in-kernel
    lp = _round_up(hp * wp + kw - 1, 128)  # per-image lane segment (128-aligned)

    op_dtype = x.dtype if mxu_dtype is None else mxu_dtype
    out_dtype = x.dtype if out_dtype is None else out_dtype  # bf16 optional

    # --- generation-aware blocking + batch padding (cdiv grid) ---------------
    num_cores = _tensorcores_per_chip()
    bn = _pick_images_per_block(n, images_per_block, num_cores)
    bn = _cap_images_for_vmem(bn, cin, cout, lp, s_cols, op_dtype, out_dtype)
    gsteps = pl.cdiv(n, bn)
    npad = gsteps * bn

    # --- input layout: cast FIRST, then pad / flatten / lane-concat (1x pass,
    #     no KH*KW inflation) ---------------------------------------------------
    xb = x.astype(op_dtype)
    xb = jnp.pad(xb, ((0, npad - n), (0, 0), (padding, padding), (padding, padding)))
    xb = xb.reshape(npad, cin, hp * wp)
    xb = jnp.pad(xb, ((0, 0), (0, 0), (0, lp - hp * wp)))
    xf = jnp.transpose(xb, (1, 0, 2)).reshape(cin, npad * lp)   # (Cin, Npad*Lp)

    # weight: (Cout,Cin,KH,KW) -> (KH*KW, Cout, Cin); conv bias dropped
    # (a per-channel constant is removed exactly by InstanceNorm2d).
    wt = jnp.transpose(weight.astype(op_dtype), (2, 3, 0, 1)).reshape(kh * kw, cout, cin)

    # validity mask over the stride-1 grid columns (also handles stride > 1 by
    # selecting every s-th row/column; invalid lanes are zeroed in the kernel).
    q = jnp.arange(s_cols)
    r, c = q // wp, q % wp
    valid = (r % s == 0) & (c % s == 0) & (r // s < ho) & (c // s < wo)
    mask = valid.astype(jnp.float32).reshape(1, s_cols)

    tap_offsets = tuple(i * wp + j for i in range(kh) for j in range(kw))
    inv_count = 1.0 / float(ho * wo)

    kernel = functools.partial(
        _conv_in_relu_kernel, bn=bn, lp=lp, s_cols=s_cols,
        tap_offsets=tap_offsets, inv_count=inv_count, use_act=use_act)

    # explicit VMEM budget: double-buffered in/out blocks + resident taps/mask
    in_blk = cin * bn * lp * jnp.dtype(op_dtype).itemsize
    out_blk = bn * cout * s_cols * jnp.dtype(out_dtype).itemsize
    const = kh * kw * cout * cin * jnp.dtype(op_dtype).itemsize + s_cols * 4
    vmem_limit = int(min(64 * 2**20,
                         max(32 * 2**20, 2 * (in_blk + out_blk) + 2 * const + (2 << 20))))

    out = pl.pallas_call(
        kernel,
        out_shape=jax.ShapeDtypeStruct((npad, cout, s_cols), out_dtype),
        grid_spec=pltpu.PrefetchScalarGridSpec(
            num_scalar_prefetch=0,
            grid=(gsteps,),
            in_specs=[
                pl.BlockSpec((kh * kw, cout, cin), lambda g: (0, 0, 0)),  # taps (const)
                pl.BlockSpec((1, s_cols), lambda g: (0, 0)),              # mask (const)
                pl.BlockSpec((cin, bn * lp), lambda g: (0, g)),           # bn images
            ],
            out_specs=pl.BlockSpec((bn, cout, s_cols), lambda g: (g, 0, 0)),
        ),
        compiler_params=pltpu.CompilerParams(
            dimension_semantics=("parallel",),
            vmem_limit_bytes=vmem_limit),
    )(wt, mask, xf)

    # (Npad, Cout, Ho1*Wp) is NCHW-flat: drop batch padding, reshape (free) and
    # crop the stride-1 grid down to the real strided output.  No transpose.
    out = out[:n].reshape(n, cout, ho1, wp)
    out = out[:, :, :(ho - 1) * s + 1:s, :(wo - 1) * s + 1:s]
    return out


def _reference(x, weight, *, stride=1, padding=1, use_act=True):
    # Plain-JAX reference: Conv2d (bias dropped -- cancelled by InstanceNorm),
    # InstanceNorm2d (biased var, eps=1e-5, affine=False), ReLU.
    out = lax.conv_general_dilated(
        x, weight, window_strides=(stride, stride),
        padding=[(padding, padding), (padding, padding)],
        dimension_numbers=("NCHW", "OIHW", "NCHW"))
    mean = out.mean(axis=(2, 3), keepdims=True)
    var = ((out - mean) ** 2).mean(axis=(2, 3), keepdims=True)
    y = (out - mean) * lax.rsqrt(var + EPS)
    if use_act:
        y = jnp.maximum(y, 0.0)
    return y


if __name__ == "__main__":
    # Small deterministic config consistent with
    # ConvBlock(in=4, out=8, kernel_size=3, stride=1, padding=1, down=True, use_act=True).
    key = jax.random.PRNGKey(0)
    kx, kw_ = jax.random.split(key, 2)

    N, CIN, COUT, H, W, KH, KW = 2, 4, 8, 16, 16, 3, 3

    x = jax.random.normal(kx, (N, CIN, H, W), dtype=jnp.float32)
    fan_in = CIN * KH * KW
    weight = jax.random.normal(kw_, (COUT, CIN, KH, KW), jnp.float32) * (1.0 / fan_in ** 0.5)
    # No conv bias: a per-channel constant is removed exactly by InstanceNorm2d.

    y = conv_block_forward(x, weight, stride=1, padding=1)
    jax.block_until_ready(y)

    # Sanity: shape, ReLU non-negativity, agreement with plain-JAX reference
    # (loose tolerance covers the bf16 MXU-operand cast).
    assert y.shape == (N, COUT, H, W)
    assert bool(jnp.all(y >= 0.0))
    y_ref = _reference(x, weight, stride=1, padding=1, use_act=True)
    max_err = float(jnp.max(jnp.abs(y - y_ref)))
    assert max_err < 0.1, f"max abs err vs reference: {max_err}"

    print("KERNEL_OK")
</pallas_src>

<mosaic_0001>
module attributes {stable_mosaic.version = 11 : i64} {
  func.func @_conv_in_relu_kernel(%arg0: i32, %arg1: memref<9x8x4xbf16, #tpu.memory_space<vmem>>, %arg2: memref<1x288xf32, #tpu.memory_space<vmem>>, %arg3: memref<4x768xbf16, #tpu.memory_space<vmem>>, %arg4: memref<2x8x288xf32, #tpu.memory_space<vmem>>) attributes {dimension_semantics = [#tpu.dimension_semantics<parallel>], iteration_bounds = array<i64: 1>, scalar_prefetch = 0 : i64, scratch_operands = 0 : i64, tpu.core_type = #tpu.core_type<tc>, window_params = [{pipeline_mode = #tpu.pipeline_mode<synchronous>, transform_indices = @transform_0, window_bounds = array<i64: 9, 8, 4>}, {pipeline_mode = #tpu.pipeline_mode<synchronous>, transform_indices = @transform_1, window_bounds = array<i64: 1, 288>}, {transform_indices = @transform_2, window_bounds = array<i64: 4, 768>}, {transform_indices = @transform_3, window_bounds = array<i64: 2, 8, 288>}]} {
    %c0 = arith.constant 0 : index
    %c0_0 = arith.constant 0 : index
    %0 = vector.load %arg3[%c0, %c0_0] : memref<4x768xbf16, #tpu.memory_space<vmem>>, vector<4x768xbf16>
    %1 = vector.extract_strided_slice %0 {offsets = [0, 0], sizes = [4, 672], strides = [1, 1]} : vector<4x768xbf16> to vector<4x672xbf16>
    %c0_1 = arith.constant 0 : index
    %c0_2 = arith.constant 0 : index
    %c0_3 = arith.constant 0 : index
    %2 = vector.load %arg1[%c0_1, %c0_2, %c0_3] : memref<9x8x4xbf16, #tpu.memory_space<vmem>>, vector<1x8x4xbf16>
    %3 = vector.shape_cast %2 : vector<1x8x4xbf16> to vector<8x4xbf16>
    %cst = arith.constant dense<0.000000e+00> : vector<8x672xf32>
    %4 = tpu.matmul %3, %1, %cst {dimension_numbers = #tpu.dot_dimension_numbers<[1], [0], [0], [1], [0, 0, 1, 1], [], []>} : vector<8x4xbf16>, vector<4x672xbf16>, vector<8x672xf32> -> vector<8x672xf32>
    %5 = vector.extract_strided_slice %0 {offsets = [0, 1], sizes = [4, 672], strides = [1, 1]} : vector<4x768xbf16> to vector<4x672xbf16>
    %c1 = arith.constant 1 : index
    %c0_4 = arith.constant 0 : index
    %c0_5 = arith.constant 0 : index
    %6 = vector.load %arg1[%c1, %c0_4, %c0_5] : memref<9x8x4xbf16, #tpu.memory_space<vmem>>, vector<1x8x4xbf16>
    %7 = vector.shape_cast %6 : vector<1x8x4xbf16> to vector<8x4xbf16>
    %cst_6 = arith.constant dense<0.000000e+00> : vector<8x672xf32>
    %8 = tpu.matmul %7, %5, %cst_6 {dimension_numbers = #tpu.dot_dimension_numbers<[1], [0], [0], [1], [0, 0, 1, 1], [], []>} : vector<8x4xbf16>, vector<4x672xbf16>, vector<8x672xf32> -> vector<8x672xf32>
    %9 = arith.addf %4, %8 : vector<8x672xf32>
    %10 = vector.extract_strided_slice %0 {offsets = [0, 2], sizes = [4, 672], strides = [1, 1]} : vector<4x768xbf16> to vector<4x672xbf16>
    %c2 = arith.constant 2 : index
    %c0_7 = arith.constant 0 : index
    %c0_8 = arith.constant 0 : index
    %11 = vector.load %arg1[%c2, %c0_7, %c0_8] : memref<9x8x4xbf16, #tpu.memory_space<vmem>>, vector<1x8x4xbf16>
    %12 = vector.shape_cast %11 : vector<1x8x4xbf16> to vector<8x4xbf16>
    %cst_9 = arith.constant dense<0.000000e+00> : vector<8x672xf32>
    %13 = tpu.matmul %12, %10, %cst_9 {dimension_numbers = #tpu.dot_dimension_numbers<[1], [0], [0], [1], [0, 0, 1, 1], [], []>} : vector<8x4xbf16>, vector<4x672xbf16>, vector<8x672xf32> -> vector<8x672xf32>
    %14 = arith.addf %9, %13 : vector<8x672xf32>
    %15 = vector.extract_strided_slice %0 {offsets = [0, 18], sizes = [4, 672], strides = [1, 1]} : vector<4x768xbf16> to vector<4x672xbf16>
    %c3 = arith.constant 3 : index
    %c0_10 = arith.constant 0 : index
    %c0_11 = arith.constant 0 : index
    %16 = vector.load %arg1[%c3, %c0_10, %c0_11] : memref<9x8x4xbf16, #tpu.memory_space<vmem>>, vector<1x8x4xbf16>
    %17 = vector.shape_cast %16 : vector<1x8x4xbf16> to vector<8x4xbf16>
    %cst_12 = arith.constant dense<0.000000e+00> : vector<8x672xf32>
    %18 = tpu.matmul %17, %15, %cst_12 {dimension_numbers = #tpu.dot_dimension_numbers<[1], [0], [0], [1], [0, 0, 1, 1], [], []>} : vector<8x4xbf16>, vector<4x672xbf16>, vector<8x672xf32> -> vector<8x672xf32>
    %19 = arith.addf %14, %18 : vector<8x672xf32>
    %20 = vector.extract_strided_slice %0 {offsets = [0, 19], sizes = [4, 672], strides = [1, 1]} : vector<4x768xbf16> to vector<4x672xbf16>
    %c4 = arith.constant 4 : index
    %c0_13 = arith.constant 0 : index
    %c0_14 = arith.constant 0 : index
    %21 = vector.load %arg1[%c4, %c0_13, %c0_14] : memref<9x8x4xbf16, #tpu.memory_space<vmem>>, vector<1x8x4xbf16>
    %22 = vector.shape_cast %21 : vector<1x8x4xbf16> to vector<8x4xbf16>
    %cst_15 = arith.constant dense<0.000000e+00> : vector<8x672xf32>
    %23 = tpu.matmul %22, %20, %cst_15 {dimension_numbers = #tpu.dot_dimension_numbers<[1], [0], [0], [1], [0, 0, 1, 1], [], []>} : vector<8x4xbf16>, vector<4x672xbf16>, vector<8x672xf32> -> vector<8x672xf32>
    %24 = arith.addf %19, %23 : vector<8x672xf32>
    %25 = vector.extract_strided_slice %0 {offsets = [0, 20], sizes = [4, 672], strides = [1, 1]} : vector<4x768xbf16> to vector<4x672xbf16>
    %c5 = arith.constant 5 : index
    %c0_16 = arith.constant 0 : index
    %c0_17 = arith.constant 0 : index
    %26 = vector.load %arg1[%c5, %c0_16, %c0_17] : memref<9x8x4xbf16, #tpu.memory_space<vmem>>, vector<1x8x4xbf16>
    %27 = vector.shape_cast %26 : vector<1x8x4xbf16> to vector<8x4xbf16>
    %cst_18 = arith.constant dense<0.000000e+00> : vector<8x672xf32>
    %28 = tpu.matmul %27, %25, %cst_18 {dimension_numbers = #tpu.dot_dimension_numbers<[1], [0], [0], [1], [0, 0, 1, 1], [], []>} : vector<8x4xbf16>, vector<4x672xbf16>, vector<8x672xf32> -> vector<8x672xf32>
    %29 = arith.addf %24, %28 : vector<8x672xf32>
    %30 = vector.extract_strided_slice %0 {offsets = [0, 36], sizes = [4, 672], strides = [1, 1]} : vector<4x768xbf16> to vector<4x672xbf16>
    %c6 = arith.constant 6 : index
    %c0_19 = arith.constant 0 : index
    %c0_20 = arith.constant 0 : index
    %31 = vector.load %arg1[%c6, %c0_19, %c0_20] : memref<9x8x4xbf16, #tpu.memory_space<vmem>>, vector<1x8x4xbf16>
    %32 = vector.shape_cast %31 : vector<1x8x4xbf16> to vector<8x4xbf16>
    %cst_21 = arith.constant dense<0.000000e+00> : vector<8x672xf32>
    %33 = tpu.matmul %32, %30, %cst_21 {dimension_numbers = #tpu.dot_dimension_numbers<[1], [0], [0], [1], [0, 0, 1, 1], [], []>} : vector<8x4xbf16>, vector<4x672xbf16>, vector<8x672xf32> -> vector<8x672xf32>
    %34 = arith.addf %29, %33 : vector<8x672xf32>
    %35 = vector.extract_strided_slice %0 {offsets = [0, 37], sizes = [4, 672], strides = [1, 1]} : vector<4x768xbf16> to vector<4x672xbf16>
    %c7 = arith.constant 7 : index
    %c0_22 = arith.constant 0 : index
    %c0_23 = arith.constant 0 : index
    %36 = vector.load %arg1[%c7, %c0_22, %c0_23] : memref<9x8x4xbf16, #tpu.memory_space<vmem>>, vector<1x8x4xbf16>
    %37 = vector.shape_cast %36 : vector<1x8x4xbf16> to vector<8x4xbf16>
    %cst_24 = arith.constant dense<0.000000e+00> : vector<8x672xf32>
    %38 = tpu.matmul %37, %35, %cst_24 {dimension_numbers = #tpu.dot_dimension_numbers<[1], [0], [0], [1], [0, 0, 1, 1], [], []>} : vector<8x4xbf16>, vector<4x672xbf16>, vector<8x672xf32> -> vector<8x672xf32>
    %39 = arith.addf %34, %38 : vector<8x672xf32>
    %40 = vector.extract_strided_slice %0 {offsets = [0, 38], sizes = [4, 672], strides = [1, 1]} : vector<4x768xbf16> to vector<4x672xbf16>
    %c8 = arith.constant 8 : index
    %c0_25 = arith.constant 0 : index
    %c0_26 = arith.constant 0 : index
    %41 = vector.load %arg1[%c8, %c0_25, %c0_26] : memref<9x8x4xbf16, #tpu.memory_space<vmem>>, vector<1x8x4xbf16>
    %42 = vector.shape_cast %41 : vector<1x8x4xbf16> to vector<8x4xbf16>
    %cst_27 = arith.constant dense<0.000000e+00> : vector<8x672xf32>
    %43 = tpu.matmul %42, %40, %cst_27 {dimension_numbers = #tpu.dot_dimension_numbers<[1], [0], [0], [1], [0, 0, 1, 1], [], []>} : vector<8x4xbf16>, vector<4x672xbf16>, vector<8x672xf32> -> vector<8x672xf32>
    %44 = arith.addf %39, %43 : vector<8x672xf32>
    %c0_28 = arith.constant 0 : index
    %c0_29 = arith.constant 0 : index
    %45 = vector.load %arg2[%c0_28, %c0_29] : memref<1x288xf32, #tpu.memory_space<vmem>>, vector<1x288xf32>
    %46 = vector.extract_strided_slice %44 {offsets = [0, 0], sizes = [8, 288], strides = [1, 1]} : vector<8x672xf32> to vector<8x288xf32>
    %47 = vector.broadcast %45 : vector<1x288xf32> to vector<8x288xf32>
    %48 = arith.mulf %46, %47 : vector<8x288xf32>
    %cst_30 = arith.constant dense<0.000000e+00> : vector<8xf32>
    %49 = vector.multi_reduction <add>, %48, %cst_30 [1] : vector<8x288xf32> to vector<8xf32>
    %50 = vector.shape_cast %49 : vector<8xf32> to vector<8x1xf32>
    %51 = arith.mulf %48, %46 : vector<8x288xf32>
    %cst_31 = arith.constant dense<0.000000e+00> : vector<8xf32>
    %52 = vector.multi_reduction <add>, %51, %cst_31 [1] : vector<8x288xf32> to vector<8xf32>
    %53 = vector.shape_cast %52 : vector<8xf32> to vector<8x1xf32>
    %cst_32 = arith.constant 3.906250e-03 : f32
    %54 = vector.broadcast %cst_32 : f32 to vector<8x1xf32>
    %55 = arith.mulf %50, %54 : vector<8x1xf32>
    %cst_33 = arith.constant 3.906250e-03 : f32
    %56 = vector.broadcast %cst_33 : f32 to vector<8x1xf32>
    %57 = arith.mulf %53, %56 : vector<8x1xf32>
    %58 = arith.mulf %55, %55 : vector<8x1xf32>
    %59 = arith.subf %57, %58 : vector<8x1xf32>
    %60 = vector.broadcast %55 : vector<8x1xf32> to vector<8x288xf32>
    %61 = arith.subf %46, %60 : vector<8x288xf32>
    %cst_34 = arith.constant 9.99999974E-6 : f32
    %62 = vector.broadcast %cst_34 : f32 to vector<8x1xf32>
    %63 = arith.addf %59, %62 : vector<8x1xf32>
    %64 = math.rsqrt %63 : vector<8x1xf32>
    %65 = vector.broadcast %64 : vector<8x1xf32> to vector<8x288xf32>
    %66 = arith.mulf %61, %65 : vector<8x288xf32>
    %cst_35 = arith.constant 0.000000e+00 : f32
    %67 = vector.broadcast %cst_35 : f32 to vector<8x288xf32>
    %68 = arith.maximumf %66, %67 : vector<8x288xf32>
    %69 = vector.broadcast %45 : vector<1x288xf32> to vector<8x288xf32>
    %70 = arith.mulf %68, %69 : vector<8x288xf32>
    %c0_36 = arith.constant 0 : index
    %c0_37 = arith.constant 0 : index
    %c0_38 = arith.constant 0 : index
    %71 = vector.load %arg4[%c0_36, %c0_37, %c0_38] : memref<2x8x288xf32, #tpu.memory_space<vmem>>, vector<1x8x288xf32>
    %72 = vector.shape_cast %71 : vector<1x8x288xf32> to vector<8x288xf32>
    %73 = vector.shape_cast %70 : vector<8x288xf32> to vector<1x8x288xf32>
    tpu.vector_store %arg4[%c0_36, %c0_37, %c0_38], %73 {strides = array<i32>} : memref<2x8x288xf32, #tpu.memory_space<vmem>>, vector<1x8x288xf32>,
    %74 = vector.extract_strided_slice %44 {offsets = [0, 384], sizes = [8, 288], strides = [1, 1]} : vector<8x672xf32> to vector<8x288xf32>
    %75 = vector.broadcast %45 : vector<1x288xf32> to vector<8x288xf32>
    %76 = arith.mulf %74, %75 : vector<8x288xf32>
    %cst_39 = arith.constant dense<0.000000e+00> : vector<8xf32>
    %77 = vector.multi_reduction <add>, %76, %cst_39 [1] : vector<8x288xf32> to vector<8xf32>
    %78 = vector.shape_cast %77 : vector<8xf32> to vector<8x1xf32>
    %79 = arith.mulf %76, %74 : vector<8x288xf32>
    %cst_40 = arith.constant dense<0.000000e+00> : vector<8xf32>
    %80 = vector.multi_reduction <add>, %79, %cst_40 [1] : vector<8x288xf32> to vector<8xf32>
    %81 = vector.shape_cast %80 : vector<8xf32> to vector<8x1xf32>
    %cst_41 = arith.constant 3.906250e-03 : f32
    %82 = vector.broadcast %cst_41 : f32 to vector<8x1xf32>
    %83 = arith.mulf %78, %82 : vector<8x1xf32>
    %cst_42 = arith.constant 3.906250e-03 : f32
    %84 = vector.broadcast %cst_42 : f32 to vector<8x1xf32>
    %85 = arith.mulf %81, %84 : vector<8x1xf32>
    %86 = arith.mulf %83, %83 : vector<8x1xf32>
    %87 = arith.subf %85, %86 : vector<8x1xf32>
    %88 = vector.broadcast %83 : vector<8x1xf32> to vector<8x288xf32>
    %89 = arith.subf %74, %88 : vector<8x288xf32>
    %cst_43 = arith.constant 9.99999974E-6 : f32
    %90 = vector.broadcast %cst_43 : f32 to vector<8x1xf32>
    %91 = arith.addf %87, %90 : vector<8x1xf32>
    %92 = math.rsqrt %91 : vector<8x1xf32>
    %93 = vector.broadcast %92 : vector<8x1xf32> to vector<8x288xf32>
    %94 = arith.mulf %89, %93 : vector<8x288xf32>
    %cst_44 = arith.constant 0.000000e+00 : f32
    %95 = vector.broadcast %cst_44 : f32 to vector<8x288xf32>
    %96 = arith.maximumf %94, %95 : vector<8x288xf32>
    %97 = vector.broadcast %45 : vector<1x288xf32> to vector<8x288xf32>
    %98 = arith.mulf %96, %97 : vector<8x288xf32>
    %c1_45 = arith.constant 1 : index
    %c0_46 = arith.constant 0 : index
    %c0_47 = arith.constant 0 : index
    %99 = vector.load %arg4[%c1_45, %c0_46, %c0_47] : memref<2x8x288xf32, #tpu.memory_space<vmem>>, vector<1x8x288xf32>
    %100 = vector.shape_cast %99 : vector<1x8x288xf32> to vector<8x288xf32>
    %101 = vector.shape_cast %98 : vector<8x288xf32> to vector<1x8x288xf32>
    tpu.vector_store %arg4[%c1_45, %c0_46, %c0_47], %101 {strides = array<i32>} : memref<2x8x288xf32, #tpu.memory_space<vmem>>, vector<1x8x288xf32>,
    return
  }
  func.func @transform_0(%arg0: i32) -> (i32, i32, i32) {
    %c0_i32 = arith.constant 0 : i32
    %c0_i32_0 = arith.constant 0 : i32
    %c0_i32_1 = arith.constant 0 : i32
    %c0_i32_2 = arith.constant 0 : i32
    return %c0_i32, %c0_i32_0, %c0_i32_1 : i32, i32, i32
  }
  func.func @transform_1(%arg0: i32) -> (i32, i32) {
    %c0_i32 = arith.constant 0 : i32
    %c0_i32_0 = arith.constant 0 : i32
    %c0_i32_1 = arith.constant 0 : i32
    return %c0_i32, %c0_i32_0 : i32, i32
  }
  func.func @transform_2(%arg0: i32) -> (i32, i32) {
    %c0_i32 = arith.constant 0 : i32
    %c0_i32_0 = arith.constant 0 : i32
    return %c0_i32, %arg0 : i32, i32
  }
  func.func @transform_3(%arg0: i32) -> (i32, i32, i32) {
    %c0_i32 = arith.constant 0 : i32
    %c0_i32_0 = arith.constant 0 : i32
    %c0_i32_1 = arith.constant 0 : i32
    return %arg0, %c0_i32, %c0_i32_0 : i32, i32, i32
  }
}

</mosaic_0001>

<llo_original>
// kernel: conv_block_forward.1
$region0: #{conv_block_forward.1}
  #allocation0 [shape = 'u32[]', space=smem, size = 0x4, offset = 0x4, fixed_abs, tag = 'smem constant byte address 0x4 - core index']
  #allocation1 [shape = 'u32[144,128]{1,0:T(1,128)}', space=vmem, size = 0x12000, scoped, tag = 'internal scratch']
  %s0 = inlined_call_operand.vmem [shape: bf16[9,8,4], index: 0, kind: input, shape index: {}]
  %s1 = inlined_call_operand.vmem [shape: f32[1,288], index: 1, kind: input, shape index: {}]
  %s2 = inlined_call_operand.vmem [shape: bf16[4,768], index: 2, kind: input, shape index: {}]
  %s3 = inlined_call_operand.vmem [shape: f32[2,8,288], index: 3, kind: output, shape index: {}]
  %s4 = sld [smem:[#allocation0]]
  $region22: #{conv_block_forward.1} parent=0
    _
  %s6 = ssub.s32 1, %s4
  %s7 = scalar_select 0, %s6, %s4
  // Predicated region
  $region2: #{conv_block_forward.1} parent=0 // pred_check
    _
  $region3: #{conv_block_forward.1} parent=0 // pred_check_branch
    %9 = sbr.rel (0) target = $region5
  $region4: #{conv_block_forward.1} parent=0 // pred_region
    _
  $region5: #{conv_block_forward.1} parent=0 // pred_fallthru
    _
  // Predicated region
  $region6: #{conv_block_forward.1} parent=0 // pred_check
    _
  $region7: #{conv_block_forward.1} parent=0 // pred_check_branch
    %11 = sbr.rel (0) target = $region9
  $region8: #{conv_block_forward.1} parent=0 // pred_region
    _
  $region9: #{conv_block_forward.1} parent=0 // pred_fallthru
    _
  // Predicated region
  $region10: #{conv_block_forward.1} parent=0 // pred_check
    _
  $region11: #{conv_block_forward.1} parent=0 // pred_check_branch
    %13 = sbr.rel (0) target = $region13
  $region12: #{conv_block_forward.1} parent=0 // pred_region
    _
  $region13: #{conv_block_forward.1} parent=0 // pred_fallthru
    _
  %v15 = vld [vmem:[%s2] sm:$0xff]
  %v16 = vld [vmem:[%s2 + $0x8] sm:$0xf]
  %v17 = vld [vmem:[%s0] sm:$0xf]
  %s18 = scalar_lea.vmem %s0, 4
  %v19 = vld [vmem:[%s18] sm:$0xf]
  %v22 = vcombine.high %v15, %v15
  %v24 = vunpack.c.l.s4 1983009808
  %v25 = vunpack.c.0.s8 %v24
  %v26 = vlaneseq
  %v27 = vshrl.u32 %v26, 7
  %v28 = vsub.s32 %v25, %v27
  %v29 = vrot.slane %v15, %v28
  %v31 = vunpack.c.l.s4 1983009808
  %v32 = vunpack.c.0.s8 %v31
  %v33 = vlaneseq
  %v34 = vshrl.u32 %v33, 7
  %v35 = vsub.s32 %v32, %v34
  %v36 = vrot.slane %v22, %v35
  %v37 = vcombine.high %v29, %v29
  %v38 = vcombine.high %v36, %v36
  %v40 = vunpack.c.l.s4 1983009808
  %v41 = vunpack.c.0.s8 %v40
  %v42 = vlaneseq
  %v43 = vshrl.u32 %v42, 7
  %v44 = vsub.s32 %v41, %v43
  %v45 = vrot.slane %v16, %v44
  %v46 = vcombine.high %v45, %v45
  %47 = vrot.lane.b32.xlu0 %v29, 127
  %v48 = vpop.permute.xlu0 %47
  %49 = vrot.lane.b32.xlu0 %v37, 127
  %v50 = vpop.permute.xlu0 %49
  %51 = vrot.lane.b32.xlu0 %v36, 127
  %v52 = vpop.permute.xlu0 %51
  %53 = vrot.lane.b32.xlu0 %v38, 127
  %v54 = vpop.permute.xlu0 %53
  %55 = vrot.lane.b32.xlu0 %v45, 127
  %v56 = vpop.permute.xlu0 %55
  %57 = vrot.lane.b32.xlu0 %v46, 127
  %v58 = vpop.permute.xlu0 %57
  %vm59 = vcmask 1039360
  %v60 = vsel %vm59, %v48, %v50
  %v61 = vsel %vm59, %v50, %v52
  %v62 = vsel %vm59, %v52, %v54
  %v63 = vsel %vm59, %v54, %v56
  %v64 = vsel %vm59, %v56, %v58
  %vm65 = vcmask 31744
  %v67 = vsel %vm65, %v19, 0
  %vm69 = vcmask 1041408
  %v71 = vsel %vm69, %v60, 0
  %v74 = vsel %vm69, %v61, 0
  %v77 = vsel %vm69, %v62, 0
  %v80 = vsel %vm69, %v63, 0
  %v83 = vsel %vm69, %v64, 0
  %v86 = vsel %vm69, %v58, 0
  %88 = vmatprep.subr.bf16.mxu0 %v74
  %89 = vmatpush1.bf16.msra.mxu0 %v71
  %90 = vmatprep.subr.bf16.mxu0 0
  %91 = vmatpush1.bf16.msra.mxu0 0
  %92 = vmatprep.subr.bf16.mxu0 0
  %93 = vmatpush1.bf16.msra.mxu0 0
  %94 = vmatprep.subr.bf16.mxu0 0
  %95 = vmatpush1.bf16.msra.mxu0 0
  %96 = vmatprep.subr.bf16.mxu0 0
  %97 = vmatpush1.bf16.msra.mxu0 0
  %98 = vmatprep.subr.bf16.mxu0 0
  %99 = vmatpush1.bf16.msra.mxu0 0
  %100 = vmatprep.subr.bf16.mxu0 0
  %101 = vmatpush1.bf16.msra.mxu0 0
  %102 = vmatprep.subr.bf16.mxu0 0
  %103 = vmatpush1.bf16.msra.mxu0 0
  %104 = vmatprep.subr.bf16.mxu0 0
  %105 = vmatpush1.bf16.msra.mxu0 0
  %106 = vmatprep.subr.bf16.mxu0 0
  %107 = vmatpush1.bf16.msra.mxu0 0
  %108 = vmatprep.subr.bf16.mxu0 0
  %109 = vmatpush1.bf16.msra.mxu0 0
  %110 = vmatprep.subr.bf16.mxu0 0
  %111 = vmatpush1.bf16.msra.mxu0 0
  %112 = vmatprep.subr.bf16.mxu0 0
  %113 = vmatpush1.bf16.msra.mxu0 0
  %114 = vmatprep.subr.bf16.mxu0 0
  %115 = vmatpush1.bf16.msra.mxu0 0
  %116 = vmatprep.subr.bf16.mxu0 0
  %117 = vmatpush1.bf16.msra.mxu0 0
  %118 = vmatprep.subr.bf16.mxu0 0
  %119 = vmatpush1.bf16.msra.mxu0 0
  %120 = vmatprep.mubr.bf16.mxu0 0
  %121 = vmatmul.mubr.bf16.gmra.mrb[0].mxu0 %v67
  %v122 = vpop.f32.mrb[0].mxu0
  %v123 = vadd.f32 0.0, %v122
  %v124 = vpop.f32.mrb[0].mxu0
  %v125 = vadd.f32 0.0, %v124
  %v126 = vpop.f32.mrb[0].mxu0
  %v127 = vpop.f32.mrb[0].mxu0
  %128 = vdwg.mxu0
  %129 = vmatprep.subr.bf16.mxu0 %v80
  %130 = vmatpush1.bf16.msra.mxu0 %v77
  %131 = vmatprep.subr.bf16.mxu0 0
  %132 = vmatpush1.bf16.msra.mxu0 0
  %133 = vmatprep.subr.bf16.mxu0 0
  %134 = vmatpush1.bf16.msra.mxu0 0
  %135 = vmatprep.subr.bf16.mxu0 0
  %136 = vmatpush1.bf16.msra.mxu0 0
  %137 = vmatprep.subr.bf16.mxu0 0
  %138 = vmatpush1.bf16.msra.mxu0 0
  %139 = vmatprep.subr.bf16.mxu0 0
  %140 = vmatpush1.bf16.msra.mxu0 0
  %141 = vmatprep.subr.bf16.mxu0 0
  %142 = vmatpush1.bf16.msra.mxu0 0
  %143 = vmatprep.subr.bf16.mxu0 0
  %144 = vmatpush1.bf16.msra.mxu0 0
  %145 = vmatprep.subr.bf16.mxu0 0
  %146 = vmatpush1.bf16.msra.mxu0 0
  %147 = vmatprep.subr.bf16.mxu0 0
  %148 = vmatpush1.bf16.msra.mxu0 0
  %149 = vmatprep.subr.bf16.mxu0 0
  %150 = vmatpush1.bf16.msra.mxu0 0
  %151 = vmatprep.subr.bf16.mxu0 0
  %152 = vmatpush1.bf16.msra.mxu0 0
  %153 = vmatprep.subr.bf16.mxu0 0
  %154 = vmatpush1.bf16.msra.mxu0 0
  %155 = vmatprep.subr.bf16.mxu0 0
  %156 = vmatpush1.bf16.msra.mxu0 0
  %157 = vmatprep.subr.bf16.mxu0 0
  %158 = vmatpush1.bf16.msra.mxu0 0
  %159 = vmatprep.subr.bf16.mxu0 0
  %160 = vmatpush1.bf16.msra.mxu0 0
  %161 = vmatprep.mubr.bf16.mxu0 0
  %162 = vmatmul.mubr.bf16.gmra.mrb[0].mxu0 %v67
  %v163 = vpop.f32.mrb[0].mxu0
  %v164 = vadd.f32 0.0, %v163
  %v165 = vpop.f32.mrb[0].mxu0
  %v166 = vadd.f32 0.0, %v165
  %v167 = vpop.f32.mrb[0].mxu0
  %v168 = vpop.f32.mrb[0].mxu0
  %169 = vdwg.mxu0
  %170 = vmatprep.subr.bf16.mxu0 %v86
  %171 = vmatpush1.bf16.msra.mxu0 %v83
  %172 = vmatprep.subr.bf16.mxu0 0
  %173 = vmatpush1.bf16.msra.mxu0 0
  %174 = vmatprep.subr.bf16.mxu0 0
  %175 = vmatpush1.bf16.msra.mxu0 0
  %176 = vmatprep.subr.bf16.mxu0 0
  %177 = vmatpush1.bf16.msra.mxu0 0
  %178 = vmatprep.subr.bf16.mxu0 0
  %179 = vmatpush1.bf16.msra.mxu0 0
  %180 = vmatprep.subr.bf16.mxu0 0
  %181 = vmatpush1.bf16.msra.mxu0 0
  %182 = vmatprep.subr.bf16.mxu0 0
  %183 = vmatpush1.bf16.msra.mxu0 0
  %184 = vmatprep.subr.bf16.mxu0 0
  %185 = vmatpush1.bf16.msra.mxu0 0
  %186 = vmatprep.subr.bf16.mxu0 0
  %187 = vmatpush1.bf16.msra.mxu0 0
  %188 = vmatprep.subr.bf16.mxu0 0
  %189 = vmatpush1.bf16.msra.mxu0 0
  %190 = vmatprep.subr.bf16.mxu0 0
  %191 = vmatpush1.bf16.msra.mxu0 0
  %192 = vmatprep.subr.bf16.mxu0 0
  %193 = vmatpush1.bf16.msra.mxu0 0
  %194 = vmatprep.subr.bf16.mxu0 0
  %195 = vmatpush1.bf16.msra.mxu0 0
  %196 = vmatprep.subr.bf16.mxu0 0
  %197 = vmatpush1.bf16.msra.mxu0 0
  %198 = vmatprep.subr.bf16.mxu0 0
  %199 = vmatpush1.bf16.msra.mxu0 0
  %200 = vmatprep.subr.bf16.mxu0 0
  %201 = vmatpush1.bf16.msra.mxu0 0
  %202 = vmatprep.mubr.bf16.mxu0 0
  %203 = vmatmul.mubr.bf16.gmra.mrb[0].mxu0 %v67
  %v204 = vpop.f32.mrb[0].mxu0
  %v205 = vadd.f32 0.0, %v204
  %v206 = vpop.f32.mrb[0].mxu0
  %v207 = vadd.f32 0.0, %v206
  %v208 = vpop.f32.mrb[0].mxu0
  %v209 = vpop.f32.mrb[0].mxu0
  %210 = vdwg.mxu0
  %v212 = vsel %vm65, %v17, 0
  %v215 = vsel %vm69, %v29, 0
  %v218 = vsel %vm69, %v37, 0
  %v221 = vsel %vm69, %v36, 0
  %v224 = vsel %vm69, %v38, 0
  %v227 = vsel %vm69, %v45, 0
  %v230 = vsel %vm69, %v46, 0
  %232 = vmatprep.subr.bf16.mxu0 %v218
  %233 = vmatpush1.bf16.msra.mxu0 %v215
  %234 = vmatprep.subr.bf16.mxu0 0
  %235 = vmatpush1.bf16.msra.mxu0 0
  %236 = vmatprep.subr.bf16.mxu0 0
  %237 = vmatpush1.bf16.msra.mxu0 0
  %238 = vmatprep.subr.bf16.mxu0 0
  %239 = vmatpush1.bf16.msra.mxu0 0
  %240 = vmatprep.subr.bf16.mxu0 0
  %241 = vmatpush1.bf16.msra.mxu0 0
  %242 = vmatprep.subr.bf16.mxu0 0
  %243 = vmatpush1.bf16.msra.mxu0 0
  %244 = vmatprep.subr.bf16.mxu0 0
  %245 = vmatpush1.bf16.msra.mxu0 0
  %246 = vmatprep.subr.bf16.mxu0 0
  %247 = vmatpush1.bf16.msra.mxu0 0
  %248 = vmatprep.subr.bf16.mxu0 0
  %249 = vmatpush1.bf16.msra.mxu0 0
  %250 = vmatprep.subr.bf16.mxu0 0
  %251 = vmatpush1.bf16.msra.mxu0 0
  %252 = vmatprep.subr.bf16.mxu0 0
  %253 = vmatpush1.bf16.msra.mxu0 0
  %254 = vmatprep.subr.bf16.mxu0 0
  %255 = vmatpush1.bf16.msra.mxu0 0
  %256 = vmatprep.subr.bf16.mxu0 0
  %257 = vmatpush1.bf16.msra.mxu0 0
  %258 = vmatprep.subr.bf16.mxu0 0
  %259 = vmatpush1.bf16.msra.mxu0 0
  %260 = vmatprep.subr.bf16.mxu0 0
  %261 = vmatpush1.bf16.msra.mxu0 0
  %262 = vmatprep.subr.bf16.mxu0 0
  %263 = vmatpush1.bf16.msra.mxu0 0
  %264 = vmatprep.mubr.bf16.mxu0 0
  %265 = vmatmul.mubr.bf16.gmra.mrb[0].mxu0 %v212
  %v266 = vpop.f32.mrb[0].mxu0
  %v267 = vadd.f32 %v123, %v266
  %v268 = vpop.f32.mrb[0].mxu0
  %v269 = vadd.f32 %v125, %v268
  %v270 = vpop.f32.mrb[0].mxu0
  %v271 = vpop.f32.mrb[0].mxu0
  %272 = vdwg.mxu0
  %273 = vmatprep.subr.bf16.mxu0 %v224
  %274 = vmatpush1.bf16.msra.mxu0 %v221
  %275 = vmatprep.subr.bf16.mxu0 0
  %276 = vmatpush1.bf16.msra.mxu0 0
  %277 = vmatprep.subr.bf16.mxu0 0
  %278 = vmatpush1.bf16.msra.mxu0 0
  %279 = vmatprep.subr.bf16.mxu0 0
  %280 = vmatpush1.bf16.msra.mxu0 0
  %281 = vmatprep.subr.bf16.mxu0 0
  %282 = vmatpush1.bf16.msra.mxu0 0
  %283 = vmatprep.subr.bf16.mxu0 0
  %284 = vmatpush1.bf16.msra.mxu0 0
  %285 = vmatprep.subr.bf16.mxu0 0
  %286 = vmatpush1.bf16.msra.mxu0 0
  %287 = vmatprep.subr.bf16.mxu0 0
  %288 = vmatpush1.bf16.msra.mxu0 0
  %289 = vmatprep.subr.bf16.mxu0 0
  %290 = vmatpush1.bf16.msra.mxu0 0
  %291 = vmatprep.subr.bf16.mxu0 0
  %292 = vmatpush1.bf16.msra.mxu0 0
  %293 = vmatprep.subr.bf16.mxu0 0
  %294 = vmatpush1.bf16.msra.mxu0 0
  %295 = vmatprep.subr.bf16.mxu0 0
  %296 = vmatpush1.bf16.msra.mxu0 0
  %297 = vmatprep.subr.bf16.mxu0 0
  %298 = vmatpush1.bf16.msra.mxu0 0
  %299 = vmatprep.subr.bf16.mxu0 0
  %300 = vmatpush1.bf16.msra.mxu0 0
  %301 = vmatprep.subr.bf16.mxu0 0
  %302 = vmatpush1.bf16.msra.mxu0 0
  %303 = vmatprep.subr.bf16.mxu0 0
  %304 = vmatpush1.bf16.msra.mxu0 0
  %305 = vmatprep.mubr.bf16.mxu0 0
  %306 = vmatmul.mubr.bf16.gmra.mrb[0].mxu0 %v212
  %v307 = vpop.f32.mrb[0].mxu0
  %v308 = vadd.f32 %v164, %v307
  %v309 = vpop.f32.mrb[0].mxu0
  %v310 = vadd.f32 %v166, %v309
  %v311 = vpop.f32.mrb[0].mxu0
  %v312 = vpop.f32.mrb[0].mxu0
  %313 = vdwg.mxu0
  %314 = vmatprep.subr.bf16.mxu0 %v230
  %315 = vmatpush1.bf16.msra.mxu0 %v227
  %316 = vmatprep.subr.bf16.mxu0 0
  %317 = vmatpush1.bf16.msra.mxu0 0
  %318 = vmatprep.subr.bf16.mxu0 0
  %319 = vmatpush1.bf16.msra.mxu0 0
  %320 = vmatprep.subr.bf16.mxu0 0
  %321 = vmatpush1.bf16.msra.mxu0 0
  %322 = vmatprep.subr.bf16.mxu0 0
  %323 = vmatpush1.bf16.msra.mxu0 0
  %324 = vmatprep.subr.bf16.mxu0 0
  %325 = vmatpush1.bf16.msra.mxu0 0
  %326 = vmatprep.subr.bf16.mxu0 0
  %327 = vmatpush1.bf16.msra.mxu0 0
  %328 = vmatprep.subr.bf16.mxu0 0
  %329 = vmatpush1.bf16.msra.mxu0 0
  %330 = vmatprep.subr.bf16.mxu0 0
  %331 = vmatpush1.bf16.msra.mxu0 0
  %332 = vmatprep.subr.bf16.mxu0 0
  %333 = vmatpush1.bf16.msra.mxu0 0
  %334 = vmatprep.subr.bf16.mxu0 0
  %335 = vmatpush1.bf16.msra.mxu0 0
  %336 = vmatprep.subr.bf16.mxu0 0
  %337 = vmatpush1.bf16.msra.mxu0 0
  %338 = vmatprep.subr.bf16.mxu0 0
  %339 = vmatpush1.bf16.msra.mxu0 0
  %340 = vmatprep.subr.bf16.mxu0 0
  %341 = vmatpush1.bf16.msra.mxu0 0
  %342 = vmatprep.subr.bf16.mxu0 0
  %343 = vmatpush1.bf16.msra.mxu0 0
  %344 = vmatprep.subr.bf16.mxu0 0
  %345 = vmatpush1.bf16.msra.mxu0 0
  %346 = vmatprep.mubr.bf16.mxu0 0
  %347 = vmatmul.mubr.bf16.gmra.mrb[0].mxu0 %v212
  %v348 = vpop.f32.mrb[0].mxu0
  %v349 = vadd.f32 %v205, %v348
  %v350 = vpop.f32.mrb[0].mxu0
  %v351 = vadd.f32 %v207, %v350
  %v352 = vpop.f32.mrb[0].mxu0
  %v353 = vpop.f32.mrb[0].mxu0
  %354 = vdwg.mxu0
  %s355 = scalar_lea.vmem %s0, 8
  %v356 = vld [vmem:[%s355] sm:$0xf]
  %357 = vrot.lane.b32.xlu0 %v29, 126
  %v358 = vpop.permute.xlu0 %357
  %359 = vrot.lane.b32.xlu0 %v37, 126
  %v360 = vpop.permute.xlu0 %359
  %361 = vrot.lane.b32.xlu0 %v36, 126
  %v362 = vpop.permute.xlu0 %361
  %363 = vrot.lane.b32.xlu0 %v38, 126
  %v364 = vpop.permute.xlu0 %363
  %365 = vrot.lane.b32.xlu0 %v45, 126
  %v366 = vpop.permute.xlu0 %365
  %367 = vrot.lane.b32.xlu0 %v46, 126
  %v368 = vpop.permute.xlu0 %367
  %vm369 = vcmask 1031168
  %v370 = vsel %vm369, %v358, %v360
  %v371 = vsel %vm369, %v360, %v362
  %v372 = vsel %vm369, %v362, %v364
  %v373 = vsel %vm369, %v364, %v366
  %v374 = vsel %vm369, %v366, %v368
  %v376 = vsel %vm65, %v356, 0
  %v379 = vsel %vm69, %v370, 0
  %v382 = vsel %vm69, %v371, 0
  %v385 = vsel %vm69, %v372, 0
  %v388 = vsel %vm69, %v373, 0
  %v391 = vsel %vm69, %v374, 0
  %v394 = vsel %vm69, %v368, 0
  %396 = vmatprep.subr.bf16.mxu0 %v382
  %397 = vmatpush1.bf16.msra.mxu0 %v379
  %398 = vmatprep.subr.bf16.mxu0 0
  %399 = vmatpush1.bf16.msra.mxu0 0
  %400 = vmatprep.subr.bf16.mxu0 0
  %401 = vmatpush1.bf16.msra.mxu0 0
  %402 = vmatprep.subr.bf16.mxu0 0
  %403 = vmatpush1.bf16.msra.mxu0 0
  %404 = vmatprep.subr.bf16.mxu0 0
  %405 = vmatpush1.bf16.msra.mxu0 0
  %406 = vmatprep.subr.bf16.mxu0 0
  %407 = vmatpush1.bf16.msra.mxu0 0
  %408 = vmatprep.subr.bf16.mxu0 0
  %409 = vmatpush1.bf16.msra.mxu0 0
  %410 = vmatprep.subr.bf16.mxu0 0
  %411 = vmatpush1.bf16.msra.mxu0 0
  %412 = vmatprep.subr.bf16.mxu0 0
  %413 = vmatpush1.bf16.msra.mxu0 0
  %414 = vmatprep.subr.bf16.mxu0 0
  %415 = vmatpush1.bf16.msra.mxu0 0
  %416 = vmatprep.subr.bf16.mxu0 0
  %417 = vmatpush1.bf16.msra.mxu0 0
  %418 = vmatprep.subr.bf16.mxu0 0
  %419 = vmatpush1.bf16.msra.mxu0 0
  %420 = vmatprep.subr.bf16.mxu0 0
  %421 = vmatpush1.bf16.msra.mxu0 0
  %422 = vmatprep.subr.bf16.mxu0 0
  %423 = vmatpush1.bf16.msra.mxu0 0
  %424 = vmatprep.subr.bf16.mxu0 0
  %425 = vmatpush1.bf16.msra.mxu0 0
  %426 = vmatprep.subr.bf16.mxu0 0
  %427 = vmatpush1.bf16.msra.mxu0 0
  %428 = vmatprep.mubr.bf16.mxu0 0
  %429 = vmatmul.mubr.bf16.gmra.mrb[0].mxu0 %v376
  %v430 = vpop.f32.mrb[0].mxu0
  %v431 = vadd.f32 0.0, %v430
  %v432 = vpop.f32.mrb[0].mxu0
  %v433 = vadd.f32 0.0, %v432
  %v434 = vpop.f32.mrb[0].mxu0
  %v435 = vpop.f32.mrb[0].mxu0
  %436 = vdwg.mxu0
  %437 = vmatprep.subr.bf16.mxu0 %v388
  %438 = vmatpush1.bf16.msra.mxu0 %v385
  %439 = vmatprep.subr.bf16.mxu0 0
  %440 = vmatpush1.bf16.msra.mxu0 0
  %441 = vmatprep.subr.bf16.mxu0 0
  %442 = vmatpush1.bf16.msra.mxu0 0
  %443 = vmatprep.subr.bf16.mxu0 0
  %444 = vmatpush1.bf16.msra.mxu0 0
  %445 = vmatprep.subr.bf16.mxu0 0
  %446 = vmatpush1.bf16.msra.mxu0 0
  %447 = vmatprep.subr.bf16.mxu0 0
  %448 = vmatpush1.bf16.msra.mxu0 0
  %449 = vmatprep.subr.bf16.mxu0 0
  %450 = vmatpush1.bf16.msra.mxu0 0
  %451 = vmatprep.subr.bf16.mxu0 0
  %452 = vmatpush1.bf16.msra.mxu0 0
  %453 = vmatprep.subr.bf16.mxu0 0
  %454 = vmatpush1.bf16.msra.mxu0 0
  %455 = vmatprep.subr.bf16.mxu0 0
  %456 = vmatpush1.bf16.msra.mxu0 0
  %457 = vmatprep.subr.bf16.mxu0 0
  %458 = vmatpush1.bf16.msra.mxu0 0
  %459 = vmatprep.subr.bf16.mxu0 0
  %460 = vmatpush1.bf16.msra.mxu0 0
  %461 = vmatprep.subr.bf16.mxu0 0
  %462 = vmatpush1.bf16.msra.mxu0 0
  %463 = vmatprep.subr.bf16.mxu0 0
  %464 = vmatpush1.bf16.msra.mxu0 0
  %465 = vmatprep.subr.bf16.mxu0 0
  %466 = vmatpush1.bf16.msra.mxu0 0
  %467 = vmatprep.subr.bf16.mxu0 0
  %468 = vmatpush1.bf16.msra.mxu0 0
  %469 = vmatprep.mubr.bf16.mxu0 0
  %470 = vmatmul.mubr.bf16.gmra.mrb[0].mxu0 %v376
  %v471 = vpop.f32.mrb[0].mxu0
  %v472 = vadd.f32 0.0, %v471
  %v473 = vpop.f32.mrb[0].mxu0
  %v474 = vadd.f32 0.0, %v473
  %v475 = vpop.f32.mrb[0].mxu0
  %v476 = vpop.f32.mrb[0].mxu0
  %477 = vdwg.mxu0
  %478 = vmatprep.subr.bf16.mxu0 %v394
  %479 = vmatpush1.bf16.msra.mxu0 %v391
  %480 = vmatprep.subr.bf16.mxu0 0
  %481 = vmatpush1.bf16.msra.mxu0 0
  %482 = vmatprep.subr.bf16.mxu0 0
  %483 = vmatpush1.bf16.msra.mxu0 0
  %484 = vmatprep.subr.bf16.mxu0 0
  %485 = vmatpush1.bf16.msra.mxu0 0
  %486 = vmatprep.subr.bf16.mxu0 0
  %487 = vmatpush1.bf16.msra.mxu0 0
  %488 = vmatprep.subr.bf16.mxu0 0
  %489 = vmatpush1.bf16.msra.mxu0 0
  %490 = vmatprep.subr.bf16.mxu0 0
  %491 = vmatpush1.bf16.msra.mxu0 0
  %492 = vmatprep.subr.bf16.mxu0 0
  %493 = vmatpush1.bf16.msra.mxu0 0
  %494 = vmatprep.subr.bf16.mxu0 0
  %495 = vmatpush1.bf16.msra.mxu0 0
  %496 = vmatprep.subr.bf16.mxu0 0
  %497 = vmatpush1.bf16.msra.mxu0 0
  %498 = vmatprep.subr.bf16.mxu0 0
  %499 = vmatpush1.bf16.msra.mxu0 0
  %500 = vmatprep.subr.bf16.mxu0 0
  %501 = vmatpush1.bf16.msra.mxu0 0
  %502 = vmatprep.subr.bf16.mxu0 0
  %503 = vmatpush1.bf16.msra.mxu0 0
  %504 = vmatprep.subr.bf16.mxu0 0
  %505 = vmatpush1.bf16.msra.mxu0 0
  %506 = vmatprep.subr.bf16.mxu0 0
  %507 = vmatpush1.bf16.msra.mxu0 0
  %508 = vmatprep.subr.bf16.mxu0 0
  %509 = vmatpush1.bf16.msra.mxu0 0
  %510 = vmatprep.mubr.bf16.mxu0 0
  %511 = vmatmul.mubr.bf16.gmra.mrb[0].mxu0 %v376
  %v512 = vpop.f32.mrb[0].mxu0
  %v513 = vadd.f32 0.0, %v512
  %v514 = vpop.f32.mrb[0].mxu0
  %v515 = vadd.f32 0.0, %v514
  %v516 = vpop.f32.mrb[0].mxu0
  %v517 = vpop.f32.mrb[0].mxu0
  %518 = vdwg.mxu0
  %v519 = vadd.f32 %v267, %v431
  %v520 = vadd.f32 %v269, %v433
  %v521 = vadd.f32 %v308, %v472
  %v522 = vadd.f32 %v310, %v474
  %v523 = vadd.f32 %v349, %v513
  %v524 = vadd.f32 %v351, %v515
  %s525 = scalar_lea.vmem %s0, 12
  %v526 = vld [vmem:[%s525] sm:$0xf]
  %527 = vrot.lane.b32.xlu0 %v29, 110
  %v528 = vpop.permute.xlu0 %527
  %529 = vrot.lane.b32.xlu0 %v37, 110
  %v530 = vpop.permute.xlu0 %529
  %531 = vrot.lane.b32.xlu0 %v36, 110
  %v532 = vpop.permute.xlu0 %531
  %533 = vrot.lane.b32.xlu0 %v38, 110
  %v534 = vpop.permute.xlu0 %533
  %535 = vrot.lane.b32.xlu0 %v45, 110
  %v536 = vpop.permute.xlu0 %535
  %537 = vrot.lane.b32.xlu0 %v46, 110
  %v538 = vpop.permute.xlu0 %537
  %vm539 = vcmask 900096
  %v540 = vsel %vm539, %v528, %v530
  %v541 = vsel %vm539, %v530, %v532
  %v542 = vsel %vm539, %v532, %v534
  %v543 = vsel %vm539, %v534, %v536
  %v544 = vsel %vm539, %v536, %v538
  %v546 = vsel %vm65, %v526, 0
  %v549 = vsel %vm69, %v540, 0
  %v552 = vsel %vm69, %v541, 0
  %v555 = vsel %vm69, %v542, 0
  %v558 = vsel %vm69, %v543, 0
  %v561 = vsel %vm69, %v544, 0
  %v564 = vsel %vm69, %v538, 0
  %566 = vmatprep.subr.bf16.mxu0 %v552
  %567 = vmatpush1.bf16.msra.mxu0 %v549
  %568 = vmatprep.subr.bf16.mxu0 0
  %569 = vmatpush1.bf16.msra.mxu0 0
  %570 = vmatprep.subr.bf16.mxu0 0
  %571 = vmatpush1.bf16.msra.mxu0 0
  %572 = vmatprep.subr.bf16.mxu0 0
  %573 = vmatpush1.bf16.msra.mxu0 0
  %574 = vmatprep.subr.bf16.mxu0 0
  %575 = vmatpush1.bf16.msra.mxu0 0
  %576 = vmatprep.subr.bf16.mxu0 0
  %577 = vmatpush1.bf16.msra.mxu0 0
  %578 = vmatprep.subr.bf16.mxu0 0
  %579 = vmatpush1.bf16.msra.mxu0 0
  %580 = vmatprep.subr.bf16.mxu0 0
  %581 = vmatpush1.bf16.msra.mxu0 0
  %582 = vmatprep.subr.bf16.mxu0 0
  %583 = vmatpush1.bf16.msra.mxu0 0
  %584 = vmatprep.subr.bf16.mxu0 0
  %585 = vmatpush1.bf16.msra.mxu0 0
  %586 = vmatprep.subr.bf16.mxu0 0
  %587 = vmatpush1.bf16.msra.mxu0 0
  %588 = vmatprep.subr.bf16.mxu0 0
  %589 = vmatpush1.bf16.msra.mxu0 0
  %590 = vmatprep.subr.bf16.mxu0 0
  %591 = vmatpush1.bf16.msra.mxu0 0
  %592 = vmatprep.subr.bf16.mxu0 0
  %593 = vmatpush1.bf16.msra.mxu0 0
  %594 = vmatprep.subr.bf16.mxu0 0
  %595 = vmatpush1.bf16.msra.mxu0 0
  %596 = vmatprep.subr.bf16.mxu0 0
  %597 = vmatpush1.bf16.msra.mxu0 0
  %598 = vmatprep.mubr.bf16.mxu0 0
  %599 = vmatmul.mubr.bf16.gmra.mrb[0].mxu0 %v546
  %v600 = vpop.f32.mrb[0].mxu0
  %v601 = vadd.f32 0.0, %v600
  %v602 = vpop.f32.mrb[0].mxu0
  %v603 = vadd.f32 0.0, %v602
  %v604 = vpop.f32.mrb[0].mxu0
  %v605 = vpop.f32.mrb[0].mxu0
  %606 = vdwg.mxu0
  %607 = vmatprep.subr.bf16.mxu0 %v558
  %608 = vmatpush1.bf16.msra.mxu0 %v555
  %609 = vmatprep.subr.bf16.mxu0 0
  %610 = vmatpush1.bf16.msra.mxu0 0
  %611 = vmatprep.subr.bf16.mxu0 0
  %612 = vmatpush1.bf16.msra.mxu0 0
  %613 = vmatprep.subr.bf16.mxu0 0
  %614 = vmatpush1.bf16.msra.mxu0 0
  %615 = vmatprep.subr.bf16.mxu0 0
  %616 = vmatpush1.bf16.msra.mxu0 0
  %617 = vmatprep.subr.bf16.mxu0 0
  %618 = vmatpush1.bf16.msra.mxu0 0
  %619 = vmatprep.subr.bf16.mxu0 0
  %620 = vmatpush1.bf16.msra.mxu0 0
  %621 = vmatprep.subr.bf16.mxu0 0
  %622 = vmatpush1.bf16.msra.mxu0 0
  %623 = vmatprep.subr.bf16.mxu0 0
  %624 = vmatpush1.bf16.msra.mxu0 0
  %625 = vmatprep.subr.bf16.mxu0 0
  %626 = vmatpush1.bf16.msra.mxu0 0
  %627 = vmatprep.subr.bf16.mxu0 0
  %628 = vmatpush1.bf16.msra.mxu0 0
  %629 = vmatprep.subr.bf16.mxu0 0
  %630 = vmatpush1.bf16.msra.mxu0 0
  %631 = vmatprep.subr.bf16.mxu0 0
  %632 = vmatpush1.bf16.msra.mxu0 0
  %633 = vmatprep.subr.bf16.mxu0 0
  %634 = vmatpush1.bf16.msra.mxu0 0
  %635 = vmatprep.subr.bf16.mxu0 0
  %636 = vmatpush1.bf16.msra.mxu0 0
  %637 = vmatprep.subr.bf16.mxu0 0
  %638 = vmatpush1.bf16.msra.mxu0 0
  %639 = vmatprep.mubr.bf16.mxu0 0
  %640 = vmatmul.mubr.bf16.gmra.mrb[0].mxu0 %v546
  %v641 = vpop.f32.mrb[0].mxu0
  %v642 = vadd.f32 0.0, %v641
  %v643 = vpop.f32.mrb[0].mxu0
  %v644 = vadd.f32 0.0, %v643
  %v645 = vpop.f32.mrb[0].mxu0
  %v646 = vpop.f32.mrb[0].mxu0
  %647 = vdwg.mxu0
  %648 = vmatprep.subr.bf16.mxu0 %v564
  %649 = vmatpush1.bf16.msra.mxu0 %v561
  %650 = vmatprep.subr.bf16.mxu0 0
  %651 = vmatpush1.bf16.msra.mxu0 0
  %652 = vmatprep.subr.bf16.mxu0 0
  %653 = vmatpush1.bf16.msra.mxu0 0
  %654 = vmatprep.subr.bf16.mxu0 0
  %655 = vmatpush1.bf16.msra.mxu0 0
  %656 = vmatprep.subr.bf16.mxu0 0
  %657 = vmatpush1.bf16.msra.mxu0 0
  %658 = vmatprep.subr.bf16.mxu0 0
  %659 = vmatpush1.bf16.msra.mxu0 0
  %660 = vmatprep.subr.bf16.mxu0 0
  %661 = vmatpush1.bf16.msra.mxu0 0
  %662 = vmatprep.subr.bf16.mxu0 0
  %663 = vmatpush1.bf16.msra.mxu0 0
  %664 = vmatprep.subr.bf16.mxu0 0
  %665 = vmatpush1.bf16.msra.mxu0 0
  %666 = vmatprep.subr.bf16.mxu0 0
  %667 = vmatpush1.bf16.msra.mxu0 0
  %668 = vmatprep.subr.bf16.mxu0 0
  %669 = vmatpush1.bf16.msra.mxu0 0
  %670 = vmatprep.subr.bf16.mxu0 0
  %671 = vmatpush1.bf16.msra.mxu0 0
  %672 = vmatprep.subr.bf16.mxu0 0
  %673 = vmatpush1.bf16.msra.mxu0 0
  %674 = vmatprep.subr.bf16.mxu0 0
  %675 = vmatpush1.bf16.msra.mxu0 0
  %676 = vmatprep.subr.bf16.mxu0 0
  %677 = vmatpush1.bf16.msra.mxu0 0
  %678 = vmatprep.subr.bf16.mxu0 0
  %679 = vmatpush1.bf16.msra.mxu0 0
  %680 = vmatprep.mubr.bf16.mxu0 0
  %681 = vmatmul.mubr.bf16.gmra.mrb[0].mxu0 %v546
  %v682 = vpop.f32.mrb[0].mxu0
  %v683 = vadd.f32 0.0, %v682
  %v684 = vpop.f32.mrb[0].mxu0
  %v685 = vadd.f32 0.0, %v684
  %v686 = vpop.f32.mrb[0].mxu0
  %v687 = vpop.f32.mrb[0].mxu0
  %688 = vdwg.mxu0
  %v689 = vadd.f32 %v519, %v601
  %v690 = vadd.f32 %v520, %v603
  %v691 = vadd.f32 %v521, %v642
  %v692 = vadd.f32 %v522, %v644
  %v693 = vadd.f32 %v523, %v683
  %v694 = vadd.f32 %v524, %v685
  %s695 = scalar_lea.vmem %s0, 16
  %v696 = vld [vmem:[%s695] sm:$0xf]
  %697 = vrot.lane.b32.xlu0 %v29, 109
  %v698 = vpop.permute.xlu0 %697
  %699 = vrot.lane.b32.xlu0 %v37, 109
  %v700 = vpop.permute.xlu0 %699
  %701 = vrot.lane.b32.xlu0 %v36, 109
  %v702 = vpop.permute.xlu0 %701
  %703 = vrot.lane.b32.xlu0 %v38, 109
  %v704 = vpop.permute.xlu0 %703
  %705 = vrot.lane.b32.xlu0 %v45, 109
  %v706 = vpop.permute.xlu0 %705
  %707 = vrot.lane.b32.xlu0 %v46, 109
  %v708 = vpop.permute.xlu0 %707
  %vm709 = vcmask 891904
  %v710 = vsel %vm709, %v698, %v700
  %v711 = vsel %vm709, %v700, %v702
  %v712 = vsel %vm709, %v702, %v704
  %v713 = vsel %vm709, %v704, %v706
  %v714 = vsel %vm709, %v706, %v708
  %v716 = vsel %vm65, %v696, 0
  %v719 = vsel %vm69, %v710, 0
  %v722 = vsel %vm69, %v711, 0
  %v725 = vsel %vm69, %v712, 0
  %v728 = vsel %vm69, %v713, 0
  %v731 = vsel %vm69, %v714, 0
  %v734 = vsel %vm69, %v708, 0
  %736 = vmatprep.subr.bf16.mxu0 %v722
  %737 = vmatpush1.bf16.msra.mxu0 %v719
  %738 = vmatprep.subr.bf16.mxu0 0
  %739 = vmatpush1.bf16.msra.mxu0 0
  %740 = vmatprep.subr.bf16.mxu0 0
  %741 = vmatpush1.bf16.msra.mxu0 0
  %742 = vmatprep.subr.bf16.mxu0 0
  %743 = vmatpush1.bf16.msra.mxu0 0
  %744 = vmatprep.subr.bf16.mxu0 0
  %745 = vmatpush1.bf16.msra.mxu0 0
  %746 = vmatprep.subr.bf16.mxu0 0
  %747 = vmatpush1.bf16.msra.mxu0 0
  %748 = vmatprep.subr.bf16.mxu0 0
  %749 = vmatpush1.bf16.msra.mxu0 0
  %750 = vmatprep.subr.bf16.mxu0 0
  %751 = vmatpush1.bf16.msra.mxu0 0
  %752 = vmatprep.subr.bf16.mxu0 0
  %753 = vmatpush1.bf16.msra.mxu0 0
  %754 = vmatprep.subr.bf16.mxu0 0
  %755 = vmatpush1.bf16.msra.mxu0 0
  %756 = vmatprep.subr.bf16.mxu0 0
  %757 = vmatpush1.bf16.msra.mxu0 0
  %758 = vmatprep.subr.bf16.mxu0 0
  %759 = vmatpush1.bf16.msra.mxu0 0
  %760 = vmatprep.subr.bf16.mxu0 0
  %761 = vmatpush1.bf16.msra.mxu0 0
  %762 = vmatprep.subr.bf16.mxu0 0
  %763 = vmatpush1.bf16.msra.mxu0 0
  %764 = vmatprep.subr.bf16.mxu0 0
  %765 = vmatpush1.bf16.msra.mxu0 0
  %766 = vmatprep.subr.bf16.mxu0 0
  %767 = vmatpush1.bf16.msra.mxu0 0
  %768 = vmatprep.mubr.bf16.mxu0 0
  %769 = vmatmul.mubr.bf16.gmra.mrb[0].mxu0 %v716
  %v770 = vpop.f32.mrb[0].mxu0
  %v771 = vadd.f32 0.0, %v770
  %v772 = vpop.f32.mrb[0].mxu0
  %v773 = vadd.f32 0.0, %v772
  %v774 = vpop.f32.mrb[0].mxu0
  %v775 = vpop.f32.mrb[0].mxu0
  %776 = vdwg.mxu0
  %777 = vmatprep.subr.bf16.mxu0 %v728
  %778 = vmatpush1.bf16.msra.mxu0 %v725
  %779 = vmatprep.subr.bf16.mxu0 0
  %780 = vmatpush1.bf16.msra.mxu0 0
  %781 = vmatprep.subr.bf16.mxu0 0
  %782 = vmatpush1.bf16.msra.mxu0 0
  %783 = vmatprep.subr.bf16.mxu0 0
  %784 = vmatpush1.bf16.msra.mxu0 0
  %785 = vmatprep.subr.bf16.mxu0 0
  %786 = vmatpush1.bf16.msra.mxu0 0
  %787 = vmatprep.subr.bf16.mxu0 0
  %788 = vmatpush1.bf16.msra.mxu0 0
  %789 = vmatprep.subr.bf16.mxu0 0
  %790 = vmatpush1.bf16.msra.mxu0 0
  %791 = vmatprep.subr.bf16.mxu0 0
  %792 = vmatpush1.bf16.msra.mxu0 0
  %793 = vmatprep.subr.bf16.mxu0 0
  %794 = vmatpush1.bf16.msra.mxu0 0
  %795 = vmatprep.subr.bf16.mxu0 0
  %796 = vmatpush1.bf16.msra.mxu0 0
  %797 = vmatprep.subr.bf16.mxu0 0
  %798 = vmatpush1.bf16.msra.mxu0 0
  %799 = vmatprep.subr.bf16.mxu0 0
  %800 = vmatpush1.bf16.msra.mxu0 0
  %801 = vmatprep.subr.bf16.mxu0 0
  %802 = vmatpush1.bf16.msra.mxu0 0
  %803 = vmatprep.subr.bf16.mxu0 0
  %804 = vmatpush1.bf16.msra.mxu0 0
  %805 = vmatprep.subr.bf16.mxu0 0
  %806 = vmatpush1.bf16.msra.mxu0 0
  %807 = vmatprep.subr.bf16.mxu0 0
  %808 = vmatpush1.bf16.msra.mxu0 0
  %809 = vmatprep.mubr.bf16.mxu0 0
  %810 = vmatmul.mubr.bf16.gmra.mrb[0].mxu0 %v716
  %v811 = vpop.f32.mrb[0].mxu0
  %v812 = vadd.f32 0.0, %v811
  %v813 = vpop.f32.mrb[0].mxu0
  %v814 = vadd.f32 0.0, %v813
  %v815 = vpop.f32.mrb[0].mxu0
  %v816 = vpop.f32.mrb[0].mxu0
  %817 = vdwg.mxu0
  %818 = vmatprep.subr.bf16.mxu0 %v734
  %819 = vmatpush1.bf16.msra.mxu0 %v731
  %820 = vmatprep.subr.bf16.mxu0 0
  %821 = vmatpush1.bf16.msra.mxu0 0
  %822 = vmatprep.subr.bf16.mxu0 0
  %823 = vmatpush1.bf16.msra.mxu0 0
  %824 = vmatprep.subr.bf16.mxu0 0
  %825 = vmatpush1.bf16.msra.mxu0 0
  %826 = vmatprep.subr.bf16.mxu0 0
  %827 = vmatpush1.bf16.msra.mxu0 0
  %828 = vmatprep.subr.bf16.mxu0 0
  %829 = vmatpush1.bf16.msra.mxu0 0
  %830 = vmatprep.subr.bf16.mxu0 0
  %831 = vmatpush1.bf16.msra.mxu0 0
  %832 = vmatprep.subr.bf16.mxu0 0
  %833 = vmatpush1.bf16.msra.mxu0 0
  %834 = vmatprep.subr.bf16.mxu0 0
  %835 = vmatpush1.bf16.msra.mxu0 0
  %836 = vmatprep.subr.bf16.mxu0 0
  %837 = vmatpush1.bf16.msra.mxu0 0
  %838 = vmatprep.subr.bf16.mxu0 0
  %839 = vmatpush1.bf16.msra.mxu0 0
  %840 = vmatprep.subr.bf16.mxu0 0
  %841 = vmatpush1.bf16.msra.mxu0 0
  %842 = vmatprep.subr.bf16.mxu0 0
  %843 = vmatpush1.bf16.msra.mxu0 0
  %844 = vmatprep.subr.bf16.mxu0 0
  %845 = vmatpush1.bf16.msra.mxu0 0
  %846 = vmatprep.subr.bf16.mxu0 0
  %847 = vmatpush1.bf16.msra.mxu0 0
  %848 = vmatprep.subr.bf16.mxu0 0
  %849 = vmatpush1.bf16.msra.mxu0 0
  %850 = vmatprep.mubr.bf16.mxu0 0
  %851 = vmatmul.mubr.bf16.gmra.mrb[0].mxu0 %v716
  %v852 = vpop.f32.mrb[0].mxu0
  %v853 = vadd.f32 0.0, %v852
  %v854 = vpop.f32.mrb[0].mxu0
  %v855 = vadd.f32 0.0, %v854
  %v856 = vpop.f32.mrb[0].mxu0
  %v857 = vpop.f32.mrb[0].mxu0
  %858 = vdwg.mxu0
  %v859 = vadd.f32 %v689, %v771
  %v860 = vadd.f32 %v690, %v773
  %v861 = vadd.f32 %v691, %v812
  %v862 = vadd.f32 %v692, %v814
  %v863 = vadd.f32 %v693, %v853
  %v864 = vadd.f32 %v694, %v855
  %s865 = scalar_lea.vmem %s0, 20
  %v866 = vld [vmem:[%s865] sm:$0xf]
  %867 = vrot.lane.b32.xlu0 %v29, 108
  %v868 = vpop.permute.xlu0 %867
  %869 = vrot.lane.b32.xlu0 %v37, 108
  %v870 = vpop.permute.xlu0 %869
  %871 = vrot.lane.b32.xlu0 %v36, 108
  %v872 = vpop.permute.xlu0 %871
  %873 = vrot.lane.b32.xlu0 %v38, 108
  %v874 = vpop.permute.xlu0 %873
  %875 = vrot.lane.b32.xlu0 %v45, 108
  %v876 = vpop.permute.xlu0 %875
  %877 = vrot.lane.b32.xlu0 %v46, 108
  %v878 = vpop.permute.xlu0 %877
  %vm879 = vcmask 883712
  %v880 = vsel %vm879, %v868, %v870
  %v881 = vsel %vm879, %v870, %v872
  %v882 = vsel %vm879, %v872, %v874
  %v883 = vsel %vm879, %v874, %v876
  %v884 = vsel %vm879, %v876, %v878
  %v886 = vsel %vm65, %v866, 0
  %v889 = vsel %vm69, %v880, 0
  %v892 = vsel %vm69, %v881, 0
  %v895 = vsel %vm69, %v882, 0
  %v898 = vsel %vm69, %v883, 0
  %v901 = vsel %vm69, %v884, 0
  %v904 = vsel %vm69, %v878, 0
  %906 = vmatprep.subr.bf16.mxu0 %v892
  %907 = vmatpush1.bf16.msra.mxu0 %v889
  %908 = vmatprep.subr.bf16.mxu0 0
  %909 = vmatpush1.bf16.msra.mxu0 0
  %910 = vmatprep.subr.bf16.mxu0 0
  %911 = vmatpush1.bf16.msra.mxu0 0
  %912 = vmatprep.subr.bf16.mxu0 0
  %913 = vmatpush1.bf16.msra.mxu0 0
  %914 = vmatprep.subr.bf16.mxu0 0
  %915 = vmatpush1.bf16.msra.mxu0 0
  %916 = vmatprep.subr.bf16.mxu0 0
  %917 = vmatpush1.bf16.msra.mxu0 0
  %918 = vmatprep.subr.bf16.mxu0 0
  %919 = vmatpush1.bf16.msra.mxu0 0
  %920 = vmatprep.subr.bf16.mxu0 0
  %921 = vmatpush1.bf16.msra.mxu0 0
  %922 = vmatprep.subr.bf16.mxu0 0
  %923 = vmatpush1.bf16.msra.mxu0 0
  %924 = vmatprep.subr.bf16.mxu0 0
  %925 = vmatpush1.bf16.msra.mxu0 0
  %926 = vmatprep.subr.bf16.mxu0 0
  %927 = vmatpush1.bf16.msra.mxu0 0
  %928 = vmatprep.subr.bf16.mxu0 0
  %929 = vmatpush1.bf16.msra.mxu0 0
  %930 = vmatprep.subr.bf16.mxu0 0
  %931 = vmatpush1.bf16.msra.mxu0 0
  %932 = vmatprep.subr.bf16.mxu0 0
  %933 = vmatpush1.bf16.msra.mxu0 0
  %934 = vmatprep.subr.bf16.mxu0 0
  %935 = vmatpush1.bf16.msra.mxu0 0
  %936 = vmatprep.subr.bf16.mxu0 0
  %937 = vmatpush1.bf16.msra.mxu0 0
  %938 = vmatprep.mubr.bf16.mxu0 0
  %939 = vmatmul.mubr.bf16.gmra.mrb[0].mxu0 %v886
  %v940 = vpop.f32.mrb[0].mxu0
  %v941 = vadd.f32 0.0, %v940
  %v942 = vpop.f32.mrb[0].mxu0
  %v943 = vadd.f32 0.0, %v942
  %v944 = vpop.f32.mrb[0].mxu0
  %v945 = vpop.f32.mrb[0].mxu0
  %946 = vdwg.mxu0
  %947 = vmatprep.subr.bf16.mxu0 %v898
  %948 = vmatpush1.bf16.msra.mxu0 %v895
  %949 = vmatprep.subr.bf16.mxu0 0
  %950 = vmatpush1.bf16.msra.mxu0 0
  %951 = vmatprep.subr.bf16.mxu0 0
  %952 = vmatpush1.bf16.msra.mxu0 0
  %953 = vmatprep.subr.bf16.mxu0 0
  %954 = vmatpush1.bf16.msra.mxu0 0
  %955 = vmatprep.subr.bf16.mxu0 0
  %956 = vmatpush1.bf16.msra.mxu0 0
  %957 = vmatprep.subr.bf16.mxu0 0
  %958 = vmatpush1.bf16.msra.mxu0 0
  %959 = vmatprep.subr.bf16.mxu0 0
  %960 = vmatpush1.bf16.msra.mxu0 0
  %961 = vmatprep.subr.bf16.mxu0 0
  %962 = vmatpush1.bf16.msra.mxu0 0
  %963 = vmatprep.subr.bf16.mxu0 0
  %964 = vmatpush1.bf16.msra.mxu0 0
  %965 = vmatprep.subr.bf16.mxu0 0
  %966 = vmatpush1.bf16.msra.mxu0 0
  %967 = vmatprep.subr.bf16.mxu0 0
  %968 = vmatpush1.bf16.msra.mxu0 0
  %969 = vmatprep.subr.bf16.mxu0 0
  %970 = vmatpush1.bf16.msra.mxu0 0
  %971 = vmatprep.subr.bf16.mxu0 0
  %972 = vmatpush1.bf16.msra.mxu0 0
  %973 = vmatprep.subr.bf16.mxu0 0
  %974 = vmatpush1.bf16.msra.mxu0 0
  %975 = vmatprep.subr.bf16.mxu0 0
  %976 = vmatpush1.bf16.msra.mxu0 0
  %977 = vmatprep.subr.bf16.mxu0 0
  %978 = vmatpush1.bf16.msra.mxu0 0
  %979 = vmatprep.mubr.bf16.mxu0 0
  %980 = vmatmul.mubr.bf16.gmra.mrb[0].mxu0 %v886
  %v981 = vpop.f32.mrb[0].mxu0
  %v982 = vadd.f32 0.0, %v981
  %v983 = vpop.f32.mrb[0].mxu0
  %v984 = vadd.f32 0.0, %v983
  %v985 = vpop.f32.mrb[0].mxu0
  %v986 = vpop.f32.mrb[0].mxu0
  %987 = vdwg.mxu0
  %988 = vmatprep.subr.bf16.mxu0 %v904
  %989 = vmatpush1.bf16.msra.mxu0 %v901
  %990 = vmatprep.subr.bf16.mxu0 0
  %991 = vmatpush1.bf16.msra.mxu0 0
  %992 = vmatprep.subr.bf16.mxu0 0
  %993 = vmatpush1.bf16.msra.mxu0 0
  %994 = vmatprep.subr.bf16.mxu0 0
  %995 = vmatpush1.bf16.msra.mxu0 0
  %996 = vmatprep.subr.bf16.mxu0 0
  %997 = vmatpush1.bf16.msra.mxu0 0
  %998 = vmatprep.subr.bf16.mxu0 0
  %999 = vmatpush1.bf16.msra.mxu0 0
  %1000 = vmatprep.subr.bf16.mxu0 0
  %1001 = vmatpush1.bf16.msra.mxu0 0
  %1002 = vmatprep.subr.bf16.mxu0 0
  %1003 = vmatpush1.bf16.msra.mxu0 0
  %1004 = vmatprep.subr.bf16.mxu0 0
  %1005 = vmatpush1.bf16.msra.mxu0 0
  %1006 = vmatprep.subr.bf16.mxu0 0
  %1007 = vmatpush1.bf16.msra.mxu0 0
  %1008 = vmatprep.subr.bf16.mxu0 0
  %1009 = vmatpush1.bf16.msra.mxu0 0
  %1010 = vmatprep.subr.bf16.mxu0 0
  %1011 = vmatpush1.bf16.msra.mxu0 0
  %1012 = vmatprep.subr.bf16.mxu0 0
  %1013 = vmatpush1.bf16.msra.mxu0 0
  %1014 = vmatprep.subr.bf16.mxu0 0
  %1015 = vmatpush1.bf16.msra.mxu0 0
  %1016 = vmatprep.subr.bf16.mxu0 0
  %1017 = vmatpush1.bf16.msra.mxu0 0
  %1018 = vmatprep.subr.bf16.mxu0 0
  %1019 = vmatpush1.bf16.msra.mxu0 0
  %1020 = vmatprep.mubr.bf16.mxu0 0
  %1021 = vmatmul.mubr.bf16.gmra.mrb[0].mxu0 %v886
  %v1022 = vpop.f32.mrb[0].mxu0
  %v1023 = vadd.f32 0.0, %v1022
  %v1024 = vpop.f32.mrb[0].mxu0
  %v1025 = vadd.f32 0.0, %v1024
  %v1026 = vpop.f32.mrb[0].mxu0
  %v1027 = vpop.f32.mrb[0].mxu0
  %1028 = vdwg.mxu0
  %v1029 = vadd.f32 %v859, %v941
  %v1030 = vadd.f32 %v860, %v943
  %v1031 = vadd.f32 %v861, %v982
  %v1032 = vadd.f32 %v862, %v984
  %v1033 = vadd.f32 %v863, %v1023
  %v1034 = vadd.f32 %v864, %v1025
  %s1035 = scalar_lea.vmem %s0, 24
  %v1036 = vld [vmem:[%s1035] sm:$0xf]
  %1037 = vrot.lane.b32.xlu0 %v29, 92
  %v1038 = vpop.permute.xlu0 %1037
  %1039 = vrot.lane.b32.xlu0 %v37, 92
  %v1040 = vpop.permute.xlu0 %1039
  %1041 = vrot.lane.b32.xlu0 %v36, 92
  %v1042 = vpop.permute.xlu0 %1041
  %1043 = vrot.lane.b32.xlu0 %v38, 92
  %v1044 = vpop.permute.xlu0 %1043
  %1045 = vrot.lane.b32.xlu0 %v45, 92
  %v1046 = vpop.permute.xlu0 %1045
  %1047 = vrot.lane.b32.xlu0 %v46, 92
  %v1048 = vpop.permute.xlu0 %1047
  %vm1049 = vcmask 752640
  %v1050 = vsel %vm1049, %v1038, %v1040
  %v1051 = vsel %vm1049, %v1040, %v1042
  %v1052 = vsel %vm1049, %v1042, %v1044
  %v1053 = vsel %vm1049, %v1044, %v1046
  %v1054 = vsel %vm1049, %v1046, %v1048
  %v1056 = vsel %vm65, %v1036, 0
  %v1059 = vsel %vm69, %v1050, 0
  %v1062 = vsel %vm69, %v1051, 0
  %v1065 = vsel %vm69, %v1052, 0
  %v1068 = vsel %vm69, %v1053, 0
  %v1071 = vsel %vm69, %v1054, 0
  %v1074 = vsel %vm69, %v1048, 0
  %1076 = vmatprep.subr.bf16.mxu0 %v1062
  %1077 = vmatpush1.bf16.msra.mxu0 %v1059
  %1078 = vmatprep.subr.bf16.mxu0 0
  %1079 = vmatpush1.bf16.msra.mxu0 0
  %1080 = vmatprep.subr.bf16.mxu0 0
  %1081 = vmatpush1.bf16.msra.mxu0 0
  %1082 = vmatprep.subr.bf16.mxu0 0
  %1083 = vmatpush1.bf16.msra.mxu0 0
  %1084 = vmatprep.subr.bf16.mxu0 0
  %1085 = vmatpush1.bf16.msra.mxu0 0
  %1086 = vmatprep.subr.bf16.mxu0 0
  %1087 = vmatpush1.bf16.msra.mxu0 0
  %1088 = vmatprep.subr.bf16.mxu0 0
  %1089 = vmatpush1.bf16.msra.mxu0 0
  %1090 = vmatprep.subr.bf16.mxu0 0
  %1091 = vmatpush1.bf16.msra.mxu0 0
  %1092 = vmatprep.subr.bf16.mxu0 0
  %1093 = vmatpush1.bf16.msra.mxu0 0
  %1094 = vmatprep.subr.bf16.mxu0 0
  %1095 = vmatpush1.bf16.msra.mxu0 0
  %1096 = vmatprep.subr.bf16.mxu0 0
  %1097 = vmatpush1.bf16.msra.mxu0 0
  %1098 = vmatprep.subr.bf16.mxu0 0
  %1099 = vmatpush1.bf16.msra.mxu0 0
  %1100 = vmatprep.subr.bf16.mxu0 0
  %1101 = vmatpush1.bf16.msra.mxu0 0
  %1102 = vmatprep.subr.bf16.mxu0 0
  %1103 = vmatpush1.bf16.msra.mxu0 0
  %1104 = vmatprep.subr.bf16.mxu0 0
  %1105 = vmatpush1.bf16.msra.mxu0 0
  %1106 = vmatprep.subr.bf16.mxu0 0
  %1107 = vmatpush1.bf16.msra.mxu0 0
  %1108 = vmatprep.mubr.bf16.mxu0 0
  %1109 = vmatmul.mubr.bf16.gmra.mrb[0].mxu0 %v1056
  %v1110 = vpop.f32.mrb[0].mxu0
  %v1111 = vadd.f32 0.0, %v1110
  %v1112 = vpop.f32.mrb[0].mxu0
  %v1113 = vadd.f32 0.0, %v1112
  %v1114 = vpop.f32.mrb[0].mxu0
  %v1115 = vpop.f32.mrb[0].mxu0
  %1116 = vdwg.mxu0
  %1117 = vmatprep.subr.bf16.mxu0 %v1068
  %1118 = vmatpush1.bf16.msra.mxu0 %v1065
  %1119 = vmatprep.subr.bf16.mxu0 0
  %1120 = vmatpush1.bf16.msra.mxu0 0
  %1121 = vmatprep.subr.bf16.mxu0 0
  %1122 = vmatpush1.bf16.msra.mxu0 0
  %1123 = vmatprep.subr.bf16.mxu0 0
  %1124 = vmatpush1.bf16.msra.mxu0 0
  %1125 = vmatprep.subr.bf16.mxu0 0
  %1126 = vmatpush1.bf16.msra.mxu0 0
  %1127 = vmatprep.subr.bf16.mxu0 0
  %1128 = vmatpush1.bf16.msra.mxu0 0
  %1129 = vmatprep.subr.bf16.mxu0 0
  %1130 = vmatpush1.bf16.msra.mxu0 0
  %1131 = vmatprep.subr.bf16.mxu0 0
  %1132 = vmatpush1.bf16.msra.mxu0 0
  %1133 = vmatprep.subr.bf16.mxu0 0
  %1134 = vmatpush1.bf16.msra.mxu0 0
  %1135 = vmatprep.subr.bf16.mxu0 0
  %1136 = vmatpush1.bf16.msra.mxu0 0
  %1137 = vmatprep.subr.bf16.mxu0 0
  %1138 = vmatpush1.bf16.msra.mxu0 0
  %1139 = vmatprep.subr.bf16.mxu0 0
  %1140 = vmatpush1.bf16.msra.mxu0 0
  %1141 = vmatprep.subr.bf16.mxu0 0
  %1142 = vmatpush1.bf16.msra.mxu0 0
  %1143 = vmatprep.subr.bf16.mxu0 0
  %1144 = vmatpush1.bf16.msra.mxu0 0
  %1145 = vmatprep.subr.bf16.mxu0 0
  %1146 = vmatpush1.bf16.msra.mxu0 0
  %1147 = vmatprep.subr.bf16.mxu0 0
  %1148 = vmatpush1.bf16.msra.mxu0 0
  %1149 = vmatprep.mubr.bf16.mxu0 0
  %1150 = vmatmul.mubr.bf16.gmra.mrb[0].mxu0 %v1056
  %v1151 = vpop.f32.mrb[0].mxu0
  %v1152 = vadd.f32 0.0, %v1151
  %v1153 = vpop.f32.mrb[0].mxu0
  %v1154 = vadd.f32 0.0, %v1153
  %v1155 = vpop.f32.mrb[0].mxu0
  %v1156 = vpop.f32.mrb[0].mxu0
  %1157 = vdwg.mxu0
  %1158 = vmatprep.subr.bf16.mxu0 %v1074
  %1159 = vmatpush1.bf16.msra.mxu0 %v1071
  %1160 = vmatprep.subr.bf16.mxu0 0
  %1161 = vmatpush1.bf16.msra.mxu0 0
  %1162 = vmatprep.subr.bf16.mxu0 0
  %1163 = vmatpush1.bf16.msra.mxu0 0
  %1164 = vmatprep.subr.bf16.mxu0 0
  %1165 = vmatpush1.bf16.msra.mxu0 0
  %1166 = vmatprep.subr.bf16.mxu0 0
  %1167 = vmatpush1.bf16.msra.mxu0 0
  %1168 = vmatprep.subr.bf16.mxu0 0
  %1169 = vmatpush1.bf16.msra.mxu0 0
  %1170 = vmatprep.subr.bf16.mxu0 0
  %1171 = vmatpush1.bf16.msra.mxu0 0
  %1172 = vmatprep.subr.bf16.mxu0 0
  %1173 = vmatpush1.bf16.msra.mxu0 0
  %1174 = vmatprep.subr.bf16.mxu0 0
  %1175 = vmatpush1.bf16.msra.mxu0 0
  %1176 = vmatprep.subr.bf16.mxu0 0
  %1177 = vmatpush1.bf16.msra.mxu0 0
  %1178 = vmatprep.subr.bf16.mxu0 0
  %1179 = vmatpush1.bf16.msra.mxu0 0
  %1180 = vmatprep.subr.bf16.mxu0 0
  %1181 = vmatpush1.bf16.msra.mxu0 0
  %1182 = vmatprep.subr.bf16.mxu0 0
  %1183 = vmatpush1.bf16.msra.mxu0 0
  %1184 = vmatprep.subr.bf16.mxu0 0
  %1185 = vmatpush1.bf16.msra.mxu0 0
  %1186 = vmatprep.subr.bf16.mxu0 0
  %1187 = vmatpush1.bf16.msra.mxu0 0
  %1188 = vmatprep.subr.bf16.mxu0 0
  %1189 = vmatpush1.bf16.msra.mxu0 0
  %1190 = vmatprep.mubr.bf16.mxu0 0
  %1191 = vmatmul.mubr.bf16.gmra.mrb[0].mxu0 %v1056
  %v1192 = vpop.f32.mrb[0].mxu0
  %v1193 = vadd.f32 0.0, %v1192
  %v1194 = vpop.f32.mrb[0].mxu0
  %v1195 = vadd.f32 0.0, %v1194
  %v1196 = vpop.f32.mrb[0].mxu0
  %v1197 = vpop.f32.mrb[0].mxu0
  %1198 = vdwg.mxu0
  %v1199 = vadd.f32 %v1029, %v1111
  %v1200 = vadd.f32 %v1030, %v1113
  %v1201 = vadd.f32 %v1031, %v1152
  %v1202 = vadd.f32 %v1032, %v1154
  %v1203 = vadd.f32 %v1033, %v1193
  %v1204 = vadd.f32 %v1034, %v1195
  %s1205 = scalar_lea.vmem %s0, 28
  %v1206 = vld [vmem:[%s1205] sm:$0xf]
  %1207 = vrot.lane.b32.xlu0 %v29, 91
  %v1208 = vpop.permute.xlu0 %1207
  %1209 = vrot.lane.b32.xlu0 %v37, 91
  %v1210 = vpop.permute.xlu0 %1209
  %1211 = vrot.lane.b32.xlu0 %v36, 91
  %v1212 = vpop.permute.xlu0 %1211
  %1213 = vrot.lane.b32.xlu0 %v38, 91
  %v1214 = vpop.permute.xlu0 %1213
  %1215 = vrot.lane.b32.xlu0 %v45, 91
  %v1216 = vpop.permute.xlu0 %1215
  %1217 = vrot.lane.b32.xlu0 %v46, 91
  %v1218 = vpop.permute.xlu0 %1217
  %vm1219 = vcmask 744448
  %v1220 = vsel %vm1219, %v1208, %v1210
  %v1221 = vsel %vm1219, %v1210, %v1212
  %v1222 = vsel %vm1219, %v1212, %v1214
  %v1223 = vsel %vm1219, %v1214, %v1216
  %v1224 = vsel %vm1219, %v1216, %v1218
  %v1226 = vsel %vm65, %v1206, 0
  %v1229 = vsel %vm69, %v1220, 0
  %v1232 = vsel %vm69, %v1221, 0
  %v1235 = vsel %vm69, %v1222, 0
  %v1238 = vsel %vm69, %v1223, 0
  %v1241 = vsel %vm69, %v1224, 0
  %v1244 = vsel %vm69, %v1218, 0
  %1246 = vmatprep.subr.bf16.mxu0 %v1232
  %1247 = vmatpush1.bf16.msra.mxu0 %v1229
  %1248 = vmatprep.subr.bf16.mxu0 0
  %1249 = vmatpush1.bf16.msra.mxu0 0
  %1250 = vmatprep.subr.bf16.mxu0 0
  %1251 = vmatpush1.bf16.msra.mxu0 0
  %1252 = vmatprep.subr.bf16.mxu0 0
  %1253 = vmatpush1.bf16.msra.mxu0 0
  %1254 = vmatprep.subr.bf16.mxu0 0
  %1255 = vmatpush1.bf16.msra.mxu0 0
  %1256 = vmatprep.subr.bf16.mxu0 0
  %1257 = vmatpush1.bf16.msra.mxu0 0
  %1258 = vmatprep.subr.bf16.mxu0 0
  %1259 = vmatpush1.bf16.msra.mxu0 0
  %1260 = vmatprep.subr.bf16.mxu0 0
  %1261 = vmatpush1.bf16.msra.mxu0 0
  %1262 = vmatprep.subr.bf16.mxu0 0
  %1263 = vmatpush1.bf16.msra.mxu0 0
  %1264 = vmatprep.subr.bf16.mxu0 0
  %1265 = vmatpush1.bf16.msra.mxu0 0
  %1266 = vmatprep.subr.bf16.mxu0 0
  %1267 = vmatpush1.bf16.msra.mxu0 0
  %1268 = vmatprep.subr.bf16.mxu0 0
  %1269 = vmatpush1.bf16.msra.mxu0 0
  %1270 = vmatprep.subr.bf16.mxu0 0
  %1271 = vmatpush1.bf16.msra.mxu0 0
  %1272 = vmatprep.subr.bf16.mxu0 0
  %1273 = vmatpush1.bf16.msra.mxu0 0
  %1274 = vmatprep.subr.bf16.mxu0 0
  %1275 = vmatpush1.bf16.msra.mxu0 0
  %1276 = vmatprep.subr.bf16.mxu0 0
  %1277 = vmatpush1.bf16.msra.mxu0 0
  %1278 = vmatprep.mubr.bf16.mxu0 0
  %1279 = vmatmul.mubr.bf16.gmra.mrb[0].mxu0 %v1226
  %v1280 = vpop.f32.mrb[0].mxu0
  %v1281 = vadd.f32 0.0, %v1280
  %v1282 = vpop.f32.mrb[0].mxu0
  %v1283 = vadd.f32 0.0, %v1282
  %v1284 = vpop.f32.mrb[0].mxu0
  %v1285 = vpop.f32.mrb[0].mxu0
  %1286 = vdwg.mxu0
  %1287 = vmatprep.subr.bf16.mxu0 %v1238
  %1288 = vmatpush1.bf16.msra.mxu0 %v1235
  %1289 = vmatprep.subr.bf16.mxu0 0
  %1290 = vmatpush1.bf16.msra.mxu0 0
  %1291 = vmatprep.subr.bf16.mxu0 0
  %1292 = vmatpush1.bf16.msra.mxu0 0
  %1293 = vmatprep.subr.bf16.mxu0 0
  %1294 = vmatpush1.bf16.msra.mxu0 0
  %1295 = vmatprep.subr.bf16.mxu0 0
  %1296 = vmatpush1.bf16.msra.mxu0 0
  %1297 = vmatprep.subr.bf16.mxu0 0
  %1298 = vmatpush1.bf16.msra.mxu0 0
  %1299 = vmatprep.subr.bf16.mxu0 0
  %1300 = vmatpush1.bf16.msra.mxu0 0
  %1301 = vmatprep.subr.bf16.mxu0 0
  %1302 = vmatpush1.bf16.msra.mxu0 0
  %1303 = vmatprep.subr.bf16.mxu0 0
  %1304 = vmatpush1.bf16.msra.mxu0 0
  %1305 = vmatprep.subr.bf16.mxu0 0
  %1306 = vmatpush1.bf16.msra.mxu0 0
  %1307 = vmatprep.subr.bf16.mxu0 0
  %1308 = vmatpush1.bf16.msra.mxu0 0
  %1309 = vmatprep.subr.bf16.mxu0 0
  %1310 = vmatpush1.bf16.msra.mxu0 0
  %1311 = vmatprep.subr.bf16.mxu0 0
  %1312 = vmatpush1.bf16.msra.mxu0 0
  %1313 = vmatprep.subr.bf16.mxu0 0
  %1314 = vmatpush1.bf16.msra.mxu0 0
  %1315 = vmatprep.subr.bf16.mxu0 0
  %1316 = vmatpush1.bf16.msra.mxu0 0
  %1317 = vmatprep.subr.bf16.mxu0 0
  %1318 = vmatpush1.bf16.msra.mxu0 0
  %1319 = vmatprep.mubr.bf16.mxu0 0
  %1320 = vmatmul.mubr.bf16.gmra.mrb[0].mxu0 %v1226
  %v1321 = vpop.f32.mrb[0].mxu0
  %v1322 = vadd.f32 0.0, %v1321
  %v1323 = vpop.f32.mrb[0].mxu0
  %v1324 = vadd.f32 0.0, %v1323
  %v1325 = vpop.f32.mrb[0].mxu0
  %v1326 = vpop.f32.mrb[0].mxu0
  %1327 = vdwg.mxu0
  %1328 = vmatprep.subr.bf16.mxu0 %v1244
  %1329 = vmatpush1.bf16.msra.mxu0 %v1241
  %1330 = vmatprep.subr.bf16.mxu0 0
  %1331 = vmatpush1.bf16.msra.mxu0 0
  %1332 = vmatprep.subr.bf16.mxu0 0
  %1333 = vmatpush1.bf16.msra.mxu0 0
  %1334 = vmatprep.subr.bf16.mxu0 0
  %1335 = vmatpush1.bf16.msra.mxu0 0
  %1336 = vmatprep.subr.bf16.mxu0 0
  %1337 = vmatpush1.bf16.msra.mxu0 0
  %1338 = vmatprep.subr.bf16.mxu0 0
  %1339 = vmatpush1.bf16.msra.mxu0 0
  %1340 = vmatprep.subr.bf16.mxu0 0
  %1341 = vmatpush1.bf16.msra.mxu0 0
  %1342 = vmatprep.subr.bf16.mxu0 0
  %1343 = vmatpush1.bf16.msra.mxu0 0
  %1344 = vmatprep.subr.bf16.mxu0 0
  %1345 = vmatpush1.bf16.msra.mxu0 0
  %1346 = vmatprep.subr.bf16.mxu0 0
  %1347 = vmatpush1.bf16.msra.mxu0 0
  %1348 = vmatprep.subr.bf16.mxu0 0
  %1349 = vmatpush1.bf16.msra.mxu0 0
  %1350 = vmatprep.subr.bf16.mxu0 0
  %1351 = vmatpush1.bf16.msra.mxu0 0
  %1352 = vmatprep.subr.bf16.mxu0 0
  %1353 = vmatpush1.bf16.msra.mxu0 0
  %1354 = vmatprep.subr.bf16.mxu0 0
  %1355 = vmatpush1.bf16.msra.mxu0 0
  %1356 = vmatprep.subr.bf16.mxu0 0
  %1357 = vmatpush1.bf16.msra.mxu0 0
  %1358 = vmatprep.subr.bf16.mxu0 0
  %1359 = vmatpush1.bf16.msra.mxu0 0
  %1360 = vmatprep.mubr.bf16.mxu0 0
  %1361 = vmatmul.mubr.bf16.gmra.mrb[0].mxu0 %v1226
  %v1362 = vpop.f32.mrb[0].mxu0
  %v1363 = vadd.f32 0.0, %v1362
  %v1364 = vpop.f32.mrb[0].mxu0
  %v1365 = vadd.f32 0.0, %v1364
  %v1366 = vpop.f32.mrb[0].mxu0
  %v1367 = vpop.f32.mrb[0].mxu0
  %1368 = vdwg.mxu0
  %v1369 = vadd.f32 %v1199, %v1281
  %v1370 = vadd.f32 %v1200, %v1283
  %v1371 = vadd.f32 %v1201, %v1322
  %v1372 = vadd.f32 %v1202, %v1324
  %v1373 = vadd.f32 %v1203, %v1363
  %v1374 = vadd.f32 %v1204, %v1365
  %s1375 = scalar_lea.vmem %s0, 32
  %v1376 = vld [vmem:[%s1375] sm:$0xf]
  %1377 = vrot.lane.b32.xlu0 %v29, 90
  %v1378 = vpop.permute.xlu0 %1377
  %1379 = vrot.lane.b32.xlu0 %v37, 90
  %v1380 = vpop.permute.xlu0 %1379
  %1381 = vrot.lane.b32.xlu0 %v36, 90
  %v1382 = vpop.permute.xlu0 %1381
  %1383 = vrot.lane.b32.xlu0 %v38, 90
  %v1384 = vpop.permute.xlu0 %1383
  %1385 = vrot.lane.b32.xlu0 %v45, 90
  %v1386 = vpop.permute.xlu0 %1385
  %1387 = vrot.lane.b32.xlu0 %v46, 90
  %v1388 = vpop.permute.xlu0 %1387
  %vm1389 = vcmask 736256
  %v1390 = vsel %vm1389, %v1378, %v1380
  %v1391 = vsel %vm1389, %v1380, %v1382
  %v1392 = vsel %vm1389, %v1382, %v1384
  %v1393 = vsel %vm1389, %v1384, %v1386
  %v1394 = vsel %vm1389, %v1386, %v1388
  %v1396 = vsel %vm65, %v1376, 0
  %v1399 = vsel %vm69, %v1390, 0
  %v1402 = vsel %vm69, %v1391, 0
  %v1405 = vsel %vm69, %v1392, 0
  %v1408 = vsel %vm69, %v1393, 0
  %v1411 = vsel %vm69, %v1394, 0
  %v1414 = vsel %vm69, %v1388, 0
  %1416 = vmatprep.subr.bf16.mxu0 %v1402
  %1417 = vmatpush1.bf16.msra.mxu0 %v1399
  %1418 = vmatprep.subr.bf16.mxu0 0
  %1419 = vmatpush1.bf16.msra.mxu0 0
  %1420 = vmatprep.subr.bf16.mxu0 0
  %1421 = vmatpush1.bf16.msra.mxu0 0
  %1422 = vmatprep.subr.bf16.mxu0 0
  %1423 = vmatpush1.bf16.msra.mxu0 0
  %1424 = vmatprep.subr.bf16.mxu0 0
  %1425 = vmatpush1.bf16.msra.mxu0 0
  %1426 = vmatprep.subr.bf16.mxu0 0
  %1427 = vmatpush1.bf16.msra.mxu0 0
  %1428 = vmatprep.subr.bf16.mxu0 0
  %1429 = vmatpush1.bf16.msra.mxu0 0
  %1430 = vmatprep.subr.bf16.mxu0 0
  %1431 = vmatpush1.bf16.msra.mxu0 0
  %1432 = vmatprep.subr.bf16.mxu0 0
  %1433 = vmatpush1.bf16.msra.mxu0 0
  %1434 = vmatprep.subr.bf16.mxu0 0
  %1435 = vmatpush1.bf16.msra.mxu0 0
  %1436 = vmatprep.subr.bf16.mxu0 0
  %1437 = vmatpush1.bf16.msra.mxu0 0
  %1438 = vmatprep.subr.bf16.mxu0 0
  %1439 = vmatpush1.bf16.msra.mxu0 0
  %1440 = vmatprep.subr.bf16.mxu0 0
  %1441 = vmatpush1.bf16.msra.mxu0 0
  %1442 = vmatprep.subr.bf16.mxu0 0
  %1443 = vmatpush1.bf16.msra.mxu0 0
  %1444 = vmatprep.subr.bf16.mxu0 0
  %1445 = vmatpush1.bf16.msra.mxu0 0
  %1446 = vmatprep.subr.bf16.mxu0 0
  %1447 = vmatpush1.bf16.msra.mxu0 0
  %1448 = vmatprep.mubr.bf16.mxu0 0
  %1449 = vmatmul.mubr.bf16.gmra.mrb[0].mxu0 %v1396
  %v1450 = vpop.f32.mrb[0].mxu0
  %v1451 = vadd.f32 0.0, %v1450
  %v1452 = vpop.f32.mrb[0].mxu0
  %v1453 = vadd.f32 0.0, %v1452
  %v1454 = vpop.f32.mrb[0].mxu0
  %v1455 = vpop.f32.mrb[0].mxu0
  %1456 = vdwg.mxu0
  %1457 = vmatprep.subr.bf16.mxu0 %v1408
  %1458 = vmatpush1.bf16.msra.mxu0 %v1405
  %1459 = vmatprep.subr.bf16.mxu0 0
  %1460 = vmatpush1.bf16.msra.mxu0 0
  %1461 = vmatprep.subr.bf16.mxu0 0
  %1462 = vmatpush1.bf16.msra.mxu0 0
  %1463 = vmatprep.subr.bf16.mxu0 0
  %1464 = vmatpush1.bf16.msra.mxu0 0
  %1465 = vmatprep.subr.bf16.mxu0 0
  %1466 = vmatpush1.bf16.msra.mxu0 0
  %1467 = vmatprep.subr.bf16.mxu0 0
  %1468 = vmatpush1.bf16.msra.mxu0 0
  %1469 = vmatprep.subr.bf16.mxu0 0
  %1470 = vmatpush1.bf16.msra.mxu0 0
  %1471 = vmatprep.subr.bf16.mxu0 0
  %1472 = vmatpush1.bf16.msra.mxu0 0
  %1473 = vmatprep.subr.bf16.mxu0 0
  %1474 = vmatpush1.bf16.msra.mxu0 0
  %1475 = vmatprep.subr.bf16.mxu0 0
  %1476 = vmatpush1.bf16.msra.mxu0 0
  %1477 = vmatprep.subr.bf16.mxu0 0
  %1478 = vmatpush1.bf16.msra.mxu0 0
  %1479 = vmatprep.subr.bf16.mxu0 0
  %1480 = vmatpush1.bf16.msra.mxu0 0
  %1481 = vmatprep.subr.bf16.mxu0 0
  %1482 = vmatpush1.bf16.msra.mxu0 0
  %1483 = vmatprep.subr.bf16.mxu0 0
  %1484 = vmatpush1.bf16.msra.mxu0 0
  %1485 = vmatprep.subr.bf16.mxu0 0
  %1486 = vmatpush1.bf16.msra.mxu0 0
  %1487 = vmatprep.subr.bf16.mxu0 0
  %1488 = vmatpush1.bf16.msra.mxu0 0
  %1489 = vmatprep.mubr.bf16.mxu0 0
  %1490 = vmatmul.mubr.bf16.gmra.mrb[0].mxu0 %v1396
  %v1491 = vpop.f32.mrb[0].mxu0
  %v1492 = vadd.f32 0.0, %v1491
  %v1493 = vpop.f32.mrb[0].mxu0
  %v1494 = vadd.f32 0.0, %v1493
  %v1495 = vpop.f32.mrb[0].mxu0
  %v1496 = vpop.f32.mrb[0].mxu0
  %1497 = vdwg.mxu0
  %1498 = vmatprep.subr.bf16.mxu0 %v1414
  %1499 = vmatpush1.bf16.msra.mxu0 %v1411
  %1500 = vmatprep.subr.bf16.mxu0 0
  %1501 = vmatpush1.bf16.msra.mxu0 0
  %1502 = vmatprep.subr.bf16.mxu0 0
  %1503 = vmatpush1.bf16.msra.mxu0 0
  %1504 = vmatprep.subr.bf16.mxu0 0
  %1505 = vmatpush1.bf16.msra.mxu0 0
  %1506 = vmatprep.subr.bf16.mxu0 0
  %1507 = vmatpush1.bf16.msra.mxu0 0
  %1508 = vmatprep.subr.bf16.mxu0 0
  %1509 = vmatpush1.bf16.msra.mxu0 0
  %1510 = vmatprep.subr.bf16.mxu0 0
  %1511 = vmatpush1.bf16.msra.mxu0 0
  %1512 = vmatprep.subr.bf16.mxu0 0
  %1513 = vmatpush1.bf16.msra.mxu0 0
  %1514 = vmatprep.subr.bf16.mxu0 0
  %1515 = vmatpush1.bf16.msra.mxu0 0
  %1516 = vmatprep.subr.bf16.mxu0 0
  %1517 = vmatpush1.bf16.msra.mxu0 0
  %1518 = vmatprep.subr.bf16.mxu0 0
  %1519 = vmatpush1.bf16.msra.mxu0 0
  %1520 = vmatprep.subr.bf16.mxu0 0
  %1521 = vmatpush1.bf16.msra.mxu0 0
  %1522 = vmatprep.subr.bf16.mxu0 0
  %1523 = vmatpush1.bf16.msra.mxu0 0
  %1524 = vmatprep.subr.bf16.mxu0 0
  %1525 = vmatpush1.bf16.msra.mxu0 0
  %1526 = vmatprep.subr.bf16.mxu0 0
  %1527 = vmatpush1.bf16.msra.mxu0 0
  %1528 = vmatprep.subr.bf16.mxu0 0
  %1529 = vmatpush1.bf16.msra.mxu0 0
  %1530 = vmatprep.mubr.bf16.mxu0 0
  %1531 = vmatmul.mubr.bf16.gmra.mrb[0].mxu0 %v1396
  %v1532 = vpop.f32.mrb[0].mxu0
  %v1533 = vadd.f32 0.0, %v1532
  %v1534 = vpop.f32.mrb[0].mxu0
  %v1535 = vadd.f32 0.0, %v1534
  %v1536 = vpop.f32.mrb[0].mxu0
  %v1537 = vpop.f32.mrb[0].mxu0
  %1538 = vdwg.mxu0
  %v1539 = vadd.f32 %v1369, %v1451
  %v1540 = vadd.f32 %v1370, %v1453
  %v1541 = vadd.f32 %v1371, %v1492
  %v1542 = vadd.f32 %v1372, %v1494
  %v1543 = vadd.f32 %v1373, %v1533
  %v1544 = vadd.f32 %v1374, %v1535
  %v1545 = vld [vmem:[%s1] sm:$0x7]
  %v1547 = vlaneseq
  %v1548 = vshrl.u32 %v1547, 7
  %v1549 = vsub.s32 0, %v1548
  %v1550 = vrot.slane %v1545, %v1549
  %v1551 = vlaneseq
  %v1552 = vshrl.u32 %v1551, 7
  %v1553 = vsub.s32 1, %v1552
  %v1554 = vrot.slane %v1545, %v1553
  %v1555 = vlaneseq
  %v1556 = vshrl.u32 %v1555, 7
  %v1557 = vsub.s32 2, %v1556
  %v1558 = vrot.slane %v1545, %v1557
  %v1562 = vmul.f32 %v1539, %v1550
  %v1563 = vmul.f32 %v1540, %v1554
  %v1564 = vmul.f32 %v1541, %v1558
  %v1565 = vadd.f32 %v1562, %v1563
  %vm1566 = vcmask 261120
  %v1567 = vsel %vm1566, %v1564, 0.0
  %v1568 = vadd.f32 %v1565, %v1567
  %1569 = vadd.xlane.f32.xlu0 %v1568
  %v1570 = vpop.xlane.xlu0 %1569
  %v1571 = vmul.f32 %v1562, %v1539
  %v1572 = vmul.f32 %v1563, %v1540
  %v1573 = vmul.f32 %v1564, %v1541
  %v1574 = vadd.f32 %v1571, %v1572
  %v1575 = vsel %vm1566, %v1573, 0.0
  %v1576 = vadd.f32 %v1574, %v1575
  %1577 = vadd.xlane.f32.xlu0 %v1576
  %v1578 = vpop.xlane.xlu0 %1577
  %v1579 = vmul.f32 %v1570, 0.00390625
  %v1580 = vmul.f32 %v1578, 0.00390625
  %v1581 = vmul.f32 %v1579, %v1579
  %v1582 = vsub.f32 %v1580, %v1581
  %v1583 = vsub.f32 %v1539, %v1579
  %v1584 = vsub.f32 %v1540, %v1579
  %v1585 = vsub.f32 %v1541, %v1579
  %v1586 = vadd.f32 %v1582, 1e-05
  %v1587 = vrsqrt.pop %v1586
  %v1588 = vmul.f32 %v1583, %v1587
  %v1589 = vmul.f32 %v1584, %v1587
  %v1590 = vmul.f32 %v1585, %v1587
  %v1591 = vmax.f32 %v1588, 0.0
  %v1592 = vmax.f32 %v1589, 0.0
  %v1593 = vmax.f32 %v1590, 0.0
  %v1594 = vmul.f32 %v1591, %v1550
  %v1595 = vmul.f32 %v1592, %v1554
  %v1596 = vmul.f32 %v1593, %v1558
  %1597 = vst [vmem:[%s3] sm:$0xff] %v1594
  %1598 = vst [vmem:[%s3 + $0x8] sm:$0xff] %v1595
  %1599 = vst.msk [vmem:[%s3 + $0x10] sm:$0xff] %vm1566, %v1596
  %v1600 = vmul.f32 %v1542, %v1550
  %v1601 = vmul.f32 %v1543, %v1554
  %v1602 = vmul.f32 %v1544, %v1558
  %v1603 = vadd.f32 %v1600, %v1601
  %v1604 = vsel %vm1566, %v1602, 0.0
  %v1605 = vadd.f32 %v1603, %v1604
  %1606 = vadd.xlane.f32.xlu0 %v1605
  %v1607 = vpop.xlane.xlu0 %1606
  %v1608 = vmul.f32 %v1600, %v1542
  %v1609 = vmul.f32 %v1601, %v1543
  %v1610 = vmul.f32 %v1602, %v1544
  %v1611 = vadd.f32 %v1608, %v1609
  %v1612 = vsel %vm1566, %v1610, 0.0
  %v1613 = vadd.f32 %v1611, %v1612
  %1614 = vadd.xlane.f32.xlu0 %v1613
  %v1615 = vpop.xlane.xlu0 %1614
  %v1616 = vmul.f32 %v1607, 0.00390625
  %v1617 = vmul.f32 %v1615, 0.00390625
  %v1618 = vmul.f32 %v1616, %v1616
  %v1619 = vsub.f32 %v1617, %v1618
  %v1620 = vsub.f32 %v1542, %v1616
  %v1621 = vsub.f32 %v1543, %v1616
  %v1622 = vsub.f32 %v1544, %v1616
  %v1623 = vadd.f32 %v1619, 1e-05
  %v1624 = vrsqrt.pop %v1623
  %v1625 = vmul.f32 %v1620, %v1624
  %v1626 = vmul.f32 %v1621, %v1624
  %v1627 = vmul.f32 %v1622, %v1624
  %v1628 = vmax.f32 %v1625, 0.0
  %v1629 = vmax.f32 %v1626, 0.0
  %v1630 = vmax.f32 %v1627, 0.0
  %v1631 = vmul.f32 %v1628, %v1550
  %v1632 = vmul.f32 %v1629, %v1554
  %v1633 = vmul.f32 %v1630, %v1558
  %s1634 = scalar_lea.vmem %s3, 24
  %1635 = vst [vmem:[%s1634] sm:$0xff] %v1631
  %1636 = vst [vmem:[%s1634 + $0x8] sm:$0xff] %v1632
  %1637 = vst.msk [vmem:[%s1634 + $0x10] sm:$0xff] %vm1566, %v1633
  // Predicated region
  $region14: #{conv_block_forward.1} parent=0 // pred_check
    _
  $region15: #{conv_block_forward.1} parent=0 // pred_check_branch
    %1639 = sbr.rel (0) target = $region17
  $region16: #{conv_block_forward.1} parent=0 // pred_region
    _
  $region17: #{conv_block_forward.1} parent=0 // pred_fallthru
    _
  // Predicated region
  $region18: #{conv_block_forward.1} parent=0 // pred_check
    _
  $region19: #{conv_block_forward.1} parent=0 // pred_check_branch
    %1641 = sbr.rel (0) target = $region21
  $region20: #{conv_block_forward.1} parent=0 // pred_region
    _
  $region21: #{conv_block_forward.1} parent=0 // pred_fallthru
    _

</llo_original>
